<compile_context>
chip_gen: v7x
topology: tpu7x:2x2x1
jax: 0.10.0
libtpu: 0.0.40
codegen_flags: <defaults>
</compile_context>

<pallas_src>
import functools

import jax
import jax.numpy as jnp
from jax.experimental import pallas as pl
from jax.experimental.pallas import tpu as pltpu


_INV_SQRT2 = 0.7071067811865476


def _erf_f32(x):
    """Abramowitz & Stegun 7.1.26 erf approximation (max abs err ~1.5e-7).

    Only abs/mul/add/exp/where on the VALU; the divide is routed to the EUP via
    pl.reciprocal(approx=True) so it co-issues with the MXU work.
    """
    a1 = 0.254829592
    a2 = -0.284496736
    a3 = 1.421413741
    a4 = -1.453152027
    a5 = 1.061405429
    p = 0.3275911
    ax = jnp.abs(x)
    t = pl.reciprocal(1.0 + p * ax, approx=True)
    poly = ((((a5 * t + a4) * t + a3) * t + a2) * t + a1) * t
    e = 1.0 - poly * jnp.exp(-ax * ax)
    return jnp.where(x < 0.0, -e, e)


def _gelu_exact(x):
    """PyTorch nn.GELU() default ('none' / erf-based) GELU."""
    return 0.5 * x * (1.0 + _erf_f32(x * _INV_SQRT2))


def _mlp_kernel(x_ref, w1_ref, b1_ref, w2_ref, b2_ref, o_ref):
    # x_ref:(TM,Cin) in x.dtype   w1_ref:(Cin,H) bf16   b1_ref:(1,H) f32
    # w2_ref:(H,Cout) bf16        b2_ref:(1,Cout) f32   o_ref:(TM,Cout) x.dtype
    x = x_ref[...].astype(w1_ref.dtype)                 # in-kernel cast -> bf16 MXU operands
    h = jnp.dot(x, w1_ref[...], preferred_element_type=jnp.float32) + b1_ref[...]
    h = _gelu_exact(h)                                  # f32 activation
    # dropout(p=0.0) == identity
    y = jnp.dot(h.astype(w2_ref.dtype), w2_ref[...],
                preferred_element_type=jnp.float32) + b2_ref[...]
    o_ref[...] = y.astype(o_ref.dtype)


def prepare_mlp_params(fc1_w, fc1_b, fc2_w, fc2_b, compute_dtype=jnp.bfloat16):
    """One-time parameter prep (do at load time, NOT per forward call).

    Transposes PyTorch nn.Linear (out,in) weights to matmul-ready (in,out) layout and casts
    them to the MXU compute dtype. Biases stay f32 (tiny; added onto the f32 accumulator).
    """
    w1t = jnp.asarray(fc1_w).T.astype(compute_dtype)    # (C_in, H)
    w2t = jnp.asarray(fc2_w).T.astype(compute_dtype)    # (H, C_out)
    b1r = jnp.asarray(fc1_b, jnp.float32).reshape(1, -1)
    b2r = jnp.asarray(fc2_b, jnp.float32).reshape(1, -1)
    return w1t, b1r, w2t, b2r


def _round_up(a, b):
    return ((a + b - 1) // b) * b


def _pick_row_tile(n_rows, c_in, hidden, c_out, in_bytes, out_bytes, w_bytes_total, block_rows):
    """Row-tile choice: multiple of 8 sublanes, >=2 grid steps when possible (v7x has 2 TCs),
    and a VMEM budget that fits the 64 MiB v7x part with headroom."""
    n8 = max(8, _round_up(n_rows, 8))
    bm = min(_round_up(block_rows, 8), n8)
    if n8 >= 16:
        bm = min(bm, max(8, _round_up(-(-n8 // 2), 8)))
    budget = 40 * 1024 * 1024   # leave slack under the 48 MiB scoped limit / 64 MiB physical (v7x)

    def _tile_bytes(m):
        # double-buffered x/out tiles + f32 hidden intermediate, grid-resident weights added by caller
        return 2 * m * (c_in * in_bytes + c_out * out_bytes) + m * hidden * 4

    while bm > 8 and w_bytes_total + _tile_bytes(bm) > budget:
        bm = max(8, _round_up(bm // 2, 8))
    return bm


@functools.partial(jax.jit, static_argnames=("block_rows",))
def mlp_forward(x, w1t, b1r, w2t, b2r, *, block_rows=512):
    """x: (..., C_in). w1t:(C_in,H), w2t:(H,C_out) pre-transposed compute-dtype weights,
    b1r:(1,H), b2r:(1,C_out) f32 biases (from prepare_mlp_params)."""
    orig_shape = x.shape
    c_in = orig_shape[-1]
    hidden = w1t.shape[1]
    c_out = w2t.shape[1]

    xf = x.reshape(-1, c_in)          # no dtype change here: no extra HBM pass over activations
    n = xf.shape[0]

    w_bytes = (w1t.size * w1t.dtype.itemsize + w2t.size * w2t.dtype.itemsize
               + b1r.size * 4 + b2r.size * 4)
    bm = _pick_row_tile(n, c_in, hidden, c_out,
                        xf.dtype.itemsize, x.dtype.itemsize, w_bytes, block_rows)

    n_pad = _round_up(n, bm)
    if n_pad != n:
        xf = jnp.pad(xf, ((0, n_pad - n), (0, 0)))

    grid = (n_pad // bm,)

    out = pl.pallas_call(
        _mlp_kernel,
        out_shape=jax.ShapeDtypeStruct((n_pad, c_out), x.dtype),
        grid=grid,
        in_specs=[
            pl.BlockSpec((bm, c_in), lambda i: (i, 0)),        # activations: tiled over rows
            pl.BlockSpec((c_in, hidden), lambda i: (0, 0)),    # fc1 weight: grid-resident (fetched once)
            pl.BlockSpec((1, hidden), lambda i: (0, 0)),       # fc1 bias
            pl.BlockSpec((hidden, c_out), lambda i: (0, 0)),   # fc2 weight: grid-resident
            pl.BlockSpec((1, c_out), lambda i: (0, 0)),        # fc2 bias
        ],
        out_specs=pl.BlockSpec((bm, c_out), lambda i: (i, 0)),
        compiler_params=pltpu.CompilerParams(
            dimension_semantics=("parallel",),    # independent row tiles -> megacore / 2-TC sharding
            vmem_limit_bytes=48 * 1024 * 1024,
        ),
    )(xf, w1t, b1r, w2t, b2r)

    if n_pad != n:
        out = out[:n]
    return out.reshape(*orig_shape[:-1], c_out)


def _reference(x, fc1_w, fc1_b, fc2_w, fc2_b):
    """Pure-JAX f32 reference of the PyTorch module forward (sanity check)."""
    h = jnp.einsum('...i,hi->...h', x, fc1_w) + fc1_b
    h = jax.nn.gelu(h, approximate=False)   # exact erf GELU == nn.GELU() default
    return jnp.einsum('...h,oh->...o', h, fc2_w) + fc2_b


if __name__ == "__main__":
    # Small transformer-MLP-like shapes: (batch, tokens, channels), hidden = 2x channels.
    B, L = 2, 256
    in_features, hidden_features, out_features = 128, 256, 128

    key = jax.random.PRNGKey(0)
    kx, k1w, k1b, k2w, k2b = jax.random.split(key, 5)
    x = jax.random.normal(kx, (B, L, in_features), jnp.float32)
    fc1_w = 0.05 * jax.random.normal(k1w, (hidden_features, in_features), jnp.float32)
    fc1_b = 0.05 * jax.random.normal(k1b, (hidden_features,), jnp.float32)
    fc2_w = 0.05 * jax.random.normal(k2w, (out_features, hidden_features), jnp.float32)
    fc2_b = 0.05 * jax.random.normal(k2b, (out_features,), jnp.float32)

    params = prepare_mlp_params(fc1_w, fc1_b, fc2_w, fc2_b)   # one-time: transpose + bf16 cast
    out = mlp_forward(x, *params, block_rows=512)
    out = jax.block_until_ready(out)

    ref = _reference(x, fc1_w, fc1_b, fc2_w, fc2_b)
    assert out.shape == (B, L, out_features), out.shape
    max_err = float(jnp.max(jnp.abs(out.astype(jnp.float32) - ref)))
    # bf16 matmuls with f32 accumulation vs. a pure-f32 reference -> relaxed tolerance.
    assert max_err < 3e-2, f"max abs err {max_err}"
    print("KERNEL_OK")
</pallas_src>

<mosaic_0001>
module attributes {stable_mosaic.version = 11 : i64} {
  func.func @_mlp_kernel(%arg0: i32, %arg1: memref<256x128xf32, #tpu.memory_space<vmem>>, %arg2: memref<128x256xbf16, #tpu.memory_space<vmem>>, %arg3: memref<1x256xf32, #tpu.memory_space<vmem>>, %arg4: memref<256x128xbf16, #tpu.memory_space<vmem>>, %arg5: memref<1x128xf32, #tpu.memory_space<vmem>>, %arg6: memref<256x128xf32, #tpu.memory_space<vmem>>) attributes {dimension_semantics = [#tpu.dimension_semantics<parallel>], iteration_bounds = array<i64: 2>, scalar_prefetch = 0 : i64, scratch_operands = 0 : i64, tpu.core_type = #tpu.core_type<tc>, window_params = [{transform_indices = @transform_0, window_bounds = array<i64: 256, 128>}, {pipeline_mode = #tpu.pipeline_mode<synchronous>, transform_indices = @transform_1, window_bounds = array<i64: 128, 256>}, {pipeline_mode = #tpu.pipeline_mode<synchronous>, transform_indices = @transform_2, window_bounds = array<i64: 1, 256>}, {pipeline_mode = #tpu.pipeline_mode<synchronous>, transform_indices = @transform_3, window_bounds = array<i64: 256, 128>}, {pipeline_mode = #tpu.pipeline_mode<synchronous>, transform_indices = @transform_4, window_bounds = array<i64: 1, 128>}, {transform_indices = @transform_5, window_bounds = array<i64: 256, 128>}]} {
    %c0 = arith.constant 0 : index
    %c0_0 = arith.constant 0 : index
    %0 = vector.load %arg1[%c0, %c0_0] : memref<256x128xf32, #tpu.memory_space<vmem>>, vector<256x128xf32>
    %1 = arith.truncf %0 : vector<256x128xf32> to vector<256x128xbf16>
    %c0_1 = arith.constant 0 : index
    %c0_2 = arith.constant 0 : index
    %2 = vector.load %arg2[%c0_1, %c0_2] : memref<128x256xbf16, #tpu.memory_space<vmem>>, vector<128x256xbf16>
    %cst = arith.constant dense<0.000000e+00> : vector<256x256xf32>
    %3 = tpu.matmul %1, %2, %cst {dimension_numbers = #tpu.dot_dimension_numbers<[1], [0], [0], [1], [0, 0, 1, 1], [], []>} : vector<256x128xbf16>, vector<128x256xbf16>, vector<256x256xf32> -> vector<256x256xf32>
    %c0_3 = arith.constant 0 : index
    %c0_4 = arith.constant 0 : index
    %4 = vector.load %arg3[%c0_3, %c0_4] : memref<1x256xf32, #tpu.memory_space<vmem>>, vector<1x256xf32>
    %5 = vector.broadcast %4 : vector<1x256xf32> to vector<256x256xf32>
    %6 = arith.addf %3, %5 : vector<256x256xf32>
    %cst_5 = arith.constant 5.000000e-01 : f32
    %7 = vector.broadcast %cst_5 : f32 to vector<256x256xf32>
    %8 = arith.mulf %7, %6 : vector<256x256xf32>
    %cst_6 = arith.constant 0.707106769 : f32
    %9 = vector.broadcast %cst_6 : f32 to vector<256x256xf32>
    %10 = arith.mulf %6, %9 : vector<256x256xf32>
    %11 = math.absf %10 : vector<256x256xf32>
    %cst_7 = arith.constant 0.327591091 : f32
    %12 = vector.broadcast %cst_7 : f32 to vector<256x256xf32>
    %13 = arith.mulf %12, %11 : vector<256x256xf32>
    %cst_8 = arith.constant 1.000000e+00 : f32
    %14 = vector.broadcast %cst_8 : f32 to vector<256x256xf32>
    %15 = arith.addf %14, %13 : vector<256x256xf32>
    %16 = tpu.reciprocal %15 {approx = true} : vector<256x256xf32> -> vector<256x256xf32>
    %cst_9 = arith.constant 1.06140542 : f32
    %17 = vector.broadcast %cst_9 : f32 to vector<256x256xf32>
    %18 = arith.mulf %17, %16 : vector<256x256xf32>
    %cst_10 = arith.constant -1.45315206 : f32
    %19 = vector.broadcast %cst_10 : f32 to vector<256x256xf32>
    %20 = arith.addf %18, %19 : vector<256x256xf32>
    %21 = arith.mulf %20, %16 : vector<256x256xf32>
    %cst_11 = arith.constant 1.42141378 : f32
    %22 = vector.broadcast %cst_11 : f32 to vector<256x256xf32>
    %23 = arith.addf %21, %22 : vector<256x256xf32>
    %24 = arith.mulf %23, %16 : vector<256x256xf32>
    %cst_12 = arith.constant -0.284496725 : f32
    %25 = vector.broadcast %cst_12 : f32 to vector<256x256xf32>
    %26 = arith.addf %24, %25 : vector<256x256xf32>
    %27 = arith.mulf %26, %16 : vector<256x256xf32>
    %cst_13 = arith.constant 0.254829586 : f32
    %28 = vector.broadcast %cst_13 : f32 to vector<256x256xf32>
    %29 = arith.addf %27, %28 : vector<256x256xf32>
    %30 = arith.mulf %29, %16 : vector<256x256xf32>
    %cst_14 = arith.constant 0.000000e+00 : f32
    %31 = vector.broadcast %cst_14 : f32 to vector<256x256xf32>
    %32 = arith.subf %31, %11 : vector<256x256xf32>
    %33 = arith.mulf %32, %11 : vector<256x256xf32>
    %34 = math.exp %33 : vector<256x256xf32>
    %35 = arith.mulf %30, %34 : vector<256x256xf32>
    %cst_15 = arith.constant 1.000000e+00 : f32
    %36 = vector.broadcast %cst_15 : f32 to vector<256x256xf32>
    %37 = arith.subf %36, %35 : vector<256x256xf32>
    %cst_16 = arith.constant 0.000000e+00 : f32
    %38 = vector.broadcast %cst_16 : f32 to vector<256x256xf32>
    %39 = arith.cmpf olt, %10, %38 : vector<256x256xf32>
    %cst_17 = arith.constant 0.000000e+00 : f32
    %40 = vector.broadcast %cst_17 : f32 to vector<256x256xf32>
    %41 = arith.subf %40, %37 : vector<256x256xf32>
    %42 = arith.select %39, %41, %37 : vector<256x256xi1>, vector<256x256xf32>
    %cst_18 = arith.constant 1.000000e+00 : f32
    %43 = vector.broadcast %cst_18 : f32 to vector<256x256xf32>
    %44 = arith.addf %43, %42 : vector<256x256xf32>
    %45 = arith.mulf %8, %44 : vector<256x256xf32>
    %46 = arith.truncf %45 : vector<256x256xf32> to vector<256x256xbf16>
    %c0_19 = arith.constant 0 : index
    %c0_20 = arith.constant 0 : index
    %47 = vector.load %arg4[%c0_19, %c0_20] : memref<256x128xbf16, #tpu.memory_space<vmem>>, vector<256x128xbf16>
    %cst_21 = arith.constant dense<0.000000e+00> : vector<256x128xf32>
    %48 = tpu.matmul %46, %47, %cst_21 {dimension_numbers = #tpu.dot_dimension_numbers<[1], [0], [0], [1], [0, 0, 1, 1], [], []>} : vector<256x256xbf16>, vector<256x128xbf16>, vector<256x128xf32> -> vector<256x128xf32>
    %c0_22 = arith.constant 0 : index
    %c0_23 = arith.constant 0 : index
    %49 = vector.load %arg5[%c0_22, %c0_23] : memref<1x128xf32, #tpu.memory_space<vmem>>, vector<1x128xf32>
    %50 = vector.broadcast %49 : vector<1x128xf32> to vector<256x128xf32>
    %51 = arith.addf %48, %50 : vector<256x128xf32>
    %c0_24 = arith.constant 0 : index
    %c0_25 = arith.constant 0 : index
    %52 = vector.load %arg6[%c0_24, %c0_25] : memref<256x128xf32, #tpu.memory_space<vmem>>, vector<256x128xf32>
    tpu.vector_store %arg6[%c0_24, %c0_25], %51 {strides = array<i32>} : memref<256x128xf32, #tpu.memory_space<vmem>>, vector<256x128xf32>,
    return
  }
  func.func @transform_0(%arg0: i32) -> (i32, i32) {
    %c0_i32 = arith.constant 0 : i32
    %c0_i32_0 = arith.constant 0 : i32
    return %arg0, %c0_i32 : i32, i32
  }
  func.func @transform_1(%arg0: i32) -> (i32, i32) {
    %c0_i32 = arith.constant 0 : i32
    %c0_i32_0 = arith.constant 0 : i32
    %c0_i32_1 = arith.constant 0 : i32
    return %c0_i32, %c0_i32_0 : i32, i32
  }
  func.func @transform_2(%arg0: i32) -> (i32, i32) {
    %c0_i32 = arith.constant 0 : i32
    %c0_i32_0 = arith.constant 0 : i32
    %c0_i32_1 = arith.constant 0 : i32
    return %c0_i32, %c0_i32_0 : i32, i32
  }
  func.func @transform_3(%arg0: i32) -> (i32, i32) {
    %c0_i32 = arith.constant 0 : i32
    %c0_i32_0 = arith.constant 0 : i32
    %c0_i32_1 = arith.constant 0 : i32
    return %c0_i32, %c0_i32_0 : i32, i32
  }
  func.func @transform_4(%arg0: i32) -> (i32, i32) {
    %c0_i32 = arith.constant 0 : i32
    %c0_i32_0 = arith.constant 0 : i32
    %c0_i32_1 = arith.constant 0 : i32
    return %c0_i32, %c0_i32_0 : i32, i32
  }
  func.func @transform_5(%arg0: i32) -> (i32, i32) {
    %c0_i32 = arith.constant 0 : i32
    %c0_i32_0 = arith.constant 0 : i32
    return %arg0, %c0_i32 : i32, i32
  }
}

</mosaic_0001>

<llo_original>
// kernel: mlp_forward.1
$region0: #{mlp_forward.1}
  #allocation0 [shape = 'u32[]', space=smem, size = 0x4, offset = 0x4, fixed_abs, tag = 'smem constant byte address 0x4 - core index']
  #allocation1 [shape = 'u32[144,128]{1,0:T(1,128)}', space=vmem, size = 0x12000, scoped, tag = 'internal scratch']
  %s0 = inlined_call_operand.hbm [shape: f32[512,128], index: 0, kind: input, shape index: {}]
  %s1 = inlined_call_operand.hbm [shape: bf16[128,256], index: 1, kind: input, shape index: {}]
  %s2 = inlined_call_operand.vmem [shape: f32[1,256], index: 2, kind: input, shape index: {}]
  %s3 = inlined_call_operand.hbm [shape: bf16[256,128], index: 3, kind: input, shape index: {}]
  %s4 = inlined_call_operand.vmem [shape: f32[1,128], index: 4, kind: input, shape index: {}]
  %s5 = inlined_call_operand.hbm [shape: f32[512,128], index: 5, kind: output, shape index: {}]
  %s6 = sld [smem:[#allocation0]]
  $region65: #{mlp_forward.1} parent=0
    _
  %s8 = ssub.s32 1, %s6
  %s9 = scalar_select 0, %s8, %s6
  $region1: #{mlp_forward.1} parent=0
    #allocation2 [shape = 'u8[262144]{0}', space=vmem, size = 0x40000, scoped, tag = 'input window, operand 0']
    #allocation3 [shape = 's32[2]{0}', space=sflag, size = 0x8, scoped, tag = 'scoped memory for mlp_forward.1']
    #allocation4 [shape = 's32[2]{0}', space=sflag, size = 0x8, scoped, tag = 'scoped memory for mlp_forward.1']
    #allocation5 [shape = 'u8[65536]{0}', space=vmem, size = 0x10000, scoped, tag = 'input window, operand 1, single buffered']
    #allocation6 [shape = 's32[1]{0}', space=sflag, size = 0x4, scoped, tag = 'scoped memory for mlp_forward.1']
    #allocation7 [shape = 'u8[65536]{0}', space=vmem, size = 0x10000, scoped, tag = 'input window, operand 3, single buffered']
    #allocation8 [shape = 'u8[262144]{0}', space=vmem, size = 0x40000, scoped, tag = 'output window, operand 0']
    %10 = vsyncpa [#allocation3], 0
    %s11 = scalar_lea.sflag [#allocation3], 1
    %12 = vsyncpa %s11, 0
    %13 = vsyncpa [#allocation6], 0
    %14 = vsyncpa [#allocation4], 0
    %s15 = scalar_lea.sflag [#allocation4], 1
    %16 = vsyncpa %s15, 0
    loop: start=0, step=1, limit=4
    $region2: #{mlp_forward.1} parent=1 // loop_pre_header
      _
    $region3: #{mlp_forward.1} parent=1 // loop_header
      %s18 = sphi 0, %s22
      %p19 = scmp.ge.s32.totalorder %s18, 4
      %s28 = sphi 0, %s30
      %s31 = sphi 0, %s28
      %s32 = sphi 0, %s31
      %s48 = sphi 0, %s32
      %s52 = sphi 0, %s52
      %s54 = sphi 0, %s52
      %s55 = sphi 0, %s54
      %s69 = sphi 0, %s55
      %s73 = sphi 0, %s73
      %s75 = sphi 0, %s73
      %s76 = sphi 0, %s75
      %s90 = sphi 0, %s76
      %s94 = sphi 0, %s94
      %s96 = sphi 0, %s94
      %s97 = sphi 0, %s96
      %s111 = sphi 0, %s97
      %s115 = sphi 0, %s115
      %s117 = sphi 0, %s115
      %s118 = sphi 0, %s117
      %s132 = sphi 0, %s118
      %s138 = sphi 0, %s140
      %s141 = sphi 0, %s138
      %s142 = sphi 0, %s141
      %s158 = sphi 0, %s142
    $region4: #{mlp_forward.1} parent=1 // loop_header_branch
      %21 = sbr.rel (%p19) target = $region8
    $region5: #{mlp_forward.1} parent=1 // loop_body
      %s23 = ssub.s32 %s18, 1
      %s24 = ssub.s32 %s18, 2
      %s25 = sadd.s32 %s18, 1
      %s26 = ssub.s32 %s18, %s25
      %p27 = scmp.eq.s32.totalorder %s26, 0
      %s29 = sadd.s32 %s28, 1
      %s30 = scalar_select %p27, %s28, %s29
      %p33 = pneg %p27
      %p34 = scmp.eq.s32.totalorder %s18, 1
      %p35 = por %p33, %p34
      %p36 = scmp.ne.s32.totalorder %s28, %s31
      %p37 = scmp.eq.s32.totalorder %s18, 0
      %p38 = por %p36, %p37
      %p39 = scmp.ne.s32.totalorder %s28, %s31
      %p40 = scmp.eq.s32.totalorder %s23, 1
      %p41 = por %p39, %p40
      %p42 = scmp.ne.s32.totalorder %s31, %s32
      %p43 = scmp.eq.s32.totalorder %s23, 0
      %p44 = por %p42, %p43
      %p45 = scmp.ne.s32.totalorder %s31, %s32
      %p46 = scmp.eq.s32.totalorder %s24, 1
      %p47 = por %p45, %p46
      %p49 = scmp.ne.s32.totalorder %s32, %s48
      %p50 = scmp.eq.s32.totalorder %s24, 0
      %p51 = por %p49, %p50
      %s53 = sadd.s32 %s52, 1
      %p56 = scmp.eq.s32.totalorder %s18, 1
      %p57 = scmp.ne.s32.totalorder %s52, %s54
      %p58 = scmp.eq.s32.totalorder %s18, 0
      %p59 = por %p57, %p58
      %p60 = scmp.ne.s32.totalorder %s52, %s54
      %p61 = scmp.eq.s32.totalorder %s23, 1
      %p62 = por %p60, %p61
      %p63 = scmp.ne.s32.totalorder %s54, %s55
      %p64 = scmp.eq.s32.totalorder %s23, 0
      %p65 = por %p63, %p64
      %p66 = scmp.ne.s32.totalorder %s54, %s55
      %p67 = scmp.eq.s32.totalorder %s24, 1
      %p68 = por %p66, %p67
      %p70 = scmp.ne.s32.totalorder %s55, %s69
      %p71 = scmp.eq.s32.totalorder %s24, 0
      %p72 = por %p70, %p71
      %s74 = sadd.s32 %s73, 1
      %p77 = scmp.eq.s32.totalorder %s18, 1
      %p78 = scmp.ne.s32.totalorder %s73, %s75
      %p79 = scmp.eq.s32.totalorder %s18, 0
      %p80 = por %p78, %p79
      %p81 = scmp.ne.s32.totalorder %s73, %s75
      %p82 = scmp.eq.s32.totalorder %s23, 1
      %p83 = por %p81, %p82
      %p84 = scmp.ne.s32.totalorder %s75, %s76
      %p85 = scmp.eq.s32.totalorder %s23, 0
      %p86 = por %p84, %p85
      %p87 = scmp.ne.s32.totalorder %s75, %s76
      %p88 = scmp.eq.s32.totalorder %s24, 1
      %p89 = por %p87, %p88
      %p91 = scmp.ne.s32.totalorder %s76, %s90
      %p92 = scmp.eq.s32.totalorder %s24, 0
      %p93 = por %p91, %p92
      %s95 = sadd.s32 %s94, 1
      %p98 = scmp.eq.s32.totalorder %s18, 1
      %p99 = scmp.ne.s32.totalorder %s94, %s96
      %p100 = scmp.eq.s32.totalorder %s18, 0
      %p101 = por %p99, %p100
      %p102 = scmp.ne.s32.totalorder %s94, %s96
      %p103 = scmp.eq.s32.totalorder %s23, 1
      %p104 = por %p102, %p103
      %p105 = scmp.ne.s32.totalorder %s96, %s97
      %p106 = scmp.eq.s32.totalorder %s23, 0
      %p107 = por %p105, %p106
      %p108 = scmp.ne.s32.totalorder %s96, %s97
      %p109 = scmp.eq.s32.totalorder %s24, 1
      %p110 = por %p108, %p109
      %p112 = scmp.ne.s32.totalorder %s97, %s111
      %p113 = scmp.eq.s32.totalorder %s24, 0
      %p114 = por %p112, %p113
      %s116 = sadd.s32 %s115, 1
      %p119 = scmp.eq.s32.totalorder %s18, 1
      %p120 = scmp.ne.s32.totalorder %s115, %s117
      %p121 = scmp.eq.s32.totalorder %s18, 0
      %p122 = por %p120, %p121
      %p123 = scmp.ne.s32.totalorder %s115, %s117
      %p124 = scmp.eq.s32.totalorder %s23, 1
      %p125 = por %p123, %p124
      %p126 = scmp.ne.s32.totalorder %s117, %s118
      %p127 = scmp.eq.s32.totalorder %s23, 0
      %p128 = por %p126, %p127
      %p129 = scmp.ne.s32.totalorder %s117, %s118
      %p130 = scmp.eq.s32.totalorder %s24, 1
      %p131 = por %p129, %p130
      %p133 = scmp.ne.s32.totalorder %s118, %s132
      %p134 = scmp.eq.s32.totalorder %s24, 0
      %p135 = por %p133, %p134
      %s136 = ssub.s32 %s18, %s25
      %p137 = scmp.eq.s32.totalorder %s136, 0
      %s139 = sadd.s32 %s138, 1
      %s140 = scalar_select %p137, %s138, %s139
      %p143 = pneg %p137
      %p144 = scmp.eq.s32.totalorder %s18, 1
      %p145 = por %p143, %p144
      %p146 = scmp.ne.s32.totalorder %s138, %s141
      %p147 = scmp.eq.s32.totalorder %s18, 0
      %p148 = por %p146, %p147
      %p149 = scmp.ne.s32.totalorder %s138, %s141
      %p150 = scmp.eq.s32.totalorder %s23, 1
      %p151 = por %p149, %p150
      %p152 = scmp.ne.s32.totalorder %s141, %s142
      %p153 = scmp.eq.s32.totalorder %s23, 0
      %p154 = por %p152, %p153
      %p155 = scmp.ne.s32.totalorder %s141, %s142
      %p156 = scmp.eq.s32.totalorder %s24, 1
      %p157 = por %p155, %p156
      %p159 = scmp.ne.s32.totalorder %s142, %s158
      %p160 = scmp.eq.s32.totalorder %s24, 0
      %p161 = por %p159, %p160
      %p162 = scmp.le.s32.totalorder 1, %s18
      %p163 = scmp.lt.s32.totalorder %s18, 3
      %p164 = pnand %p162, %p163
      %p165 = pneg %p164
      // Predicated region
      $region9: #{mlp_forward.1} parent=5 // pred_check
        _
      $region10: #{mlp_forward.1} parent=5 // pred_check_branch
        %167 = sbr.rel (%p164) target = $region12
      $region11: #{mlp_forward.1} parent=5 // pred_region
        %s168 = ssub.s32 %s18, 1
        // Predicated region
        $region13: #{mlp_forward.1} parent=11 // pred_check
          %p169 = pneg %p65
        $region14: #{mlp_forward.1} parent=11 // pred_check_branch
          %171 = sbr.rel (%p169) target = $region16
        $region15: #{mlp_forward.1} parent=11 // pred_region
          %s173 = ssub.s32 2048, 2048
          %174 = vsyncadd [#allocation6], %s173
          %s175 = sshll.u32 [#allocation5], 4
          %s176 = int_to_ptr.vmem [resolvable:$true] %s175
          %181 = dma.hbm_to_vmem [thread:$0]  %s1, 2048, %s176, [#allocation6], 128, 128, 8
        $region16: #{mlp_forward.1} parent=11 // pred_fallthru
          _
        // Predicated region
        $region17: #{mlp_forward.1} parent=11 // pred_check
          %p182 = pneg %p86
        $region18: #{mlp_forward.1} parent=11 // pred_check_branch
          %184 = sbr.rel (%p182) target = $region20
        $region19: #{mlp_forward.1} parent=11 // pred_region
          _
        $region20: #{mlp_forward.1} parent=11 // pred_fallthru
          _
        // Predicated region
        $region21: #{mlp_forward.1} parent=11 // pred_check
          %p185 = pneg %p107
        $region22: #{mlp_forward.1} parent=11 // pred_check_branch
          %187 = sbr.rel (%p185) target = $region24
        $region23: #{mlp_forward.1} parent=11 // pred_region
          %s189 = ssub.s32 2048, 2048
          %190 = vsyncadd [#allocation6], %s189
          %s191 = sshll.u32 [#allocation7], 4
          %s192 = int_to_ptr.vmem [resolvable:$true] %s191
          %197 = dma.hbm_to_vmem [thread:$0]  %s3, 2048, %s192, [#allocation6], 64, 64, 4
        $region24: #{mlp_forward.1} parent=11 // pred_fallthru
          _
        // Predicated region
        $region25: #{mlp_forward.1} parent=11 // pred_check
          %p198 = pneg %p128
        $region26: #{mlp_forward.1} parent=11 // pred_check_branch
          %200 = sbr.rel (%p198) target = $region28
        $region27: #{mlp_forward.1} parent=11 // pred_region
          _
        $region28: #{mlp_forward.1} parent=11 // pred_fallthru
          _
      $region12: #{mlp_forward.1} parent=5 // pred_fallthru
        _
      %p201 = scmp.lt.s32.totalorder %s18, 2
      // Predicated region
      $region29: #{mlp_forward.1} parent=5 // pred_check
        %p202 = pneg %p201
      $region30: #{mlp_forward.1} parent=5 // pred_check_branch
        %204 = sbr.rel (%p202) target = $region32
      $region31: #{mlp_forward.1} parent=5 // pred_region
        // Predicated region
        $region33: #{mlp_forward.1} parent=31 // pred_check
          %p205 = pneg %p38
        $region34: #{mlp_forward.1} parent=31 // pred_check_branch
          %207 = sbr.rel (%p205) target = $region36
        $region35: #{mlp_forward.1} parent=31 // pred_region
          %s208 = sand.u32 %s28, 1
          %s209 = scalar_lea.sflag [#allocation3], %s208
          %s210 = sand.u32 %s28, 1
          %s211 = smul.addr %s210, 256
          %s212 = scalar_lea.vmem [#allocation2], %s211
          %s213 = smul.u32 32, %s18
          %s215 = ssub.s32 4096, 4096
          %216 = vsyncadd %s209, %s215
          %s217 = smul.addr %s213, 128
          %s218 = scalar_lea.hbm %s0, %s217
          %s219 = sshll.u32 %s212, 4
          %s220 = int_to_ptr.vmem [resolvable:$true] %s219
          %225 = dma.hbm_to_vmem [thread:$0]  %s218, 4096, %s220, %s209, 128, 128, 8
        $region36: #{mlp_forward.1} parent=31 // pred_fallthru
          _
      $region32: #{mlp_forward.1} parent=5 // pred_fallthru
        _
      %p226 = scmp.le.s32.totalorder 1, %s18
      %p227 = scmp.lt.s32.totalorder %s18, 3
      %p228 = pnand %p226, %p227
      %p229 = pneg %p228
      // Predicated region
      $region37: #{mlp_forward.1} parent=5 // pred_check
        _
      $region38: #{mlp_forward.1} parent=5 // pred_check_branch
        %231 = sbr.rel (%p228) target = $region40
      $region39: #{mlp_forward.1} parent=5 // pred_region
        %s232 = ssub.s32 %s18, 1
        %s233 = sand.u32 %s31, 1
        %s234 = scalar_lea.sflag [#allocation3], %s233
        %s235 = sand.u32 %s31, 1
        %s236 = smul.addr %s235, 256
        %s237 = scalar_lea.vmem [#allocation2], %s236
        // Predicated region
        $region41: #{mlp_forward.1} parent=39 // pred_check
          %p238 = pneg %p44
        $region42: #{mlp_forward.1} parent=39 // pred_check_branch
          %240 = sbr.rel (%p238) target = $region44
        $region43: #{mlp_forward.1} parent=39 // pred_region
          %241 = dma.done %s234, 4096
        $region44: #{mlp_forward.1} parent=39 // pred_fallthru
          _
        // Predicated region
        $region45: #{mlp_forward.1} parent=39 // pred_check
          %p242 = pneg %p65
        $region46: #{mlp_forward.1} parent=39 // pred_check_branch
          %244 = sbr.rel (%p242) target = $region48
        $region47: #{mlp_forward.1} parent=39 // pred_region
          %245 = dma.done [#allocation6], 2048
        $region48: #{mlp_forward.1} parent=39 // pred_fallthru
          _
        // Predicated region
        $region49: #{mlp_forward.1} parent=39 // pred_check
          %p246 = pneg %p107
        $region50: #{mlp_forward.1} parent=39 // pred_check_branch
          %248 = sbr.rel (%p246) target = $region52
        $region51: #{mlp_forward.1} parent=39 // pred_region
          %249 = dma.done [#allocation6], 2048
        $region52: #{mlp_forward.1} parent=39 // pred_fallthru
          _
        %s250 = sand.u32 %s31, 1
        %s251 = scalar_lea.sflag [#allocation3], %s250
        %s252 = sand.u32 %s31, 1
        %s253 = smul.addr %s252, 256
        %s254 = scalar_lea.vmem [#allocation2], %s253
        %p255 = pneg %p44
        %p256 = pneg %p41
        %p257 = pneg %p65
        %p258 = pneg %p62
        %p259 = pneg %p86
        %p260 = pneg %p83
        %p261 = pneg %p107
        %p262 = pneg %p104
        %p263 = pneg %p128
        %p264 = pneg %p125
        %p265 = pneg %p154
        %p266 = pneg %p151
        %s267 = sand.u32 %s141, 1
        %s268 = scalar_lea.sflag [#allocation4], %s267
        %s269 = sand.u32 %s141, 1
        %s270 = smul.addr %s269, 256
        %s271 = scalar_lea.vmem [#allocation8], %s270
        %s272 = smul.u32 32, %s23
        %s273 = smul.u32 32, %s23
        %v275 = vld [vmem:[%s237] sm:$0xff]
        %v276 = vld [vmem:[%s237 + $0x8] sm:$0xff]
        %v277 = vld [vmem:[%s237 + $0x10] sm:$0xff]
        %v278 = vld [vmem:[%s237 + $0x18] sm:$0xff]
        %v279 = vld [vmem:[%s237 + $0x20] sm:$0xff]
        %v280 = vld [vmem:[%s237 + $0x28] sm:$0xff]
        %v281 = vld [vmem:[%s237 + $0x30] sm:$0xff]
        %v282 = vld [vmem:[%s237 + $0x38] sm:$0xff]
        %v283 = vld [vmem:[%s237 + $0x40] sm:$0xff]
        %v284 = vld [vmem:[%s237 + $0x48] sm:$0xff]
        %v285 = vld [vmem:[%s237 + $0x50] sm:$0xff]
        %v286 = vld [vmem:[%s237 + $0x58] sm:$0xff]
        %v287 = vld [vmem:[%s237 + $0x60] sm:$0xff]
        %v288 = vld [vmem:[%s237 + $0x68] sm:$0xff]
        %v289 = vld [vmem:[%s237 + $0x70] sm:$0xff]
        %v290 = vld [vmem:[%s237 + $0x78] sm:$0xff]
        %v291 = vld [vmem:[%s237 + $0x80] sm:$0xff]
        %v292 = vld [vmem:[%s237 + $0x88] sm:$0xff]
        %v293 = vld [vmem:[%s237 + $0x90] sm:$0xff]
        %v294 = vld [vmem:[%s237 + $0x98] sm:$0xff]
        %v295 = vld [vmem:[%s237 + $0xa0] sm:$0xff]
        %v296 = vld [vmem:[%s237 + $0xa8] sm:$0xff]
        %v297 = vld [vmem:[%s237 + $0xb0] sm:$0xff]
        %v298 = vld [vmem:[%s237 + $0xb8] sm:$0xff]
        %v299 = vld [vmem:[%s237 + $0xc0] sm:$0xff]
        %v300 = vld [vmem:[%s237 + $0xc8] sm:$0xff]
        %v301 = vld [vmem:[%s237 + $0xd0] sm:$0xff]
        %v302 = vld [vmem:[%s237 + $0xd8] sm:$0xff]
        %v303 = vld [vmem:[%s237 + $0xe0] sm:$0xff]
        %v304 = vld [vmem:[%s237 + $0xe8] sm:$0xff]
        %v305 = vld [vmem:[%s237 + $0xf0] sm:$0xff]
        %v306 = vld [vmem:[%s237 + $0xf8] sm:$0xff]
        %v307 = vpack.c.bf16 %v276, %v275
        %v308 = vpack.c.bf16 %v278, %v277
        %v309 = vpack.c.bf16 %v280, %v279
        %v310 = vpack.c.bf16 %v282, %v281
        %v311 = vpack.c.bf16 %v284, %v283
        %v312 = vpack.c.bf16 %v286, %v285
        %v313 = vpack.c.bf16 %v288, %v287
        %v314 = vpack.c.bf16 %v290, %v289
        %v315 = vpack.c.bf16 %v292, %v291
        %v316 = vpack.c.bf16 %v294, %v293
        %v317 = vpack.c.bf16 %v296, %v295
        %v318 = vpack.c.bf16 %v298, %v297
        %v319 = vpack.c.bf16 %v300, %v299
        %v320 = vpack.c.bf16 %v302, %v301
        %v321 = vpack.c.bf16 %v304, %v303
        %v322 = vpack.c.bf16 %v306, %v305
        %v323 = vld [vmem:[#allocation5] sm:$0xff]
        %v324 = vld [vmem:[#allocation5 + $0x8] sm:$0xff]
        %v325 = vld [vmem:[#allocation5 + $0x10] sm:$0xff]
        %v326 = vld [vmem:[#allocation5 + $0x18] sm:$0xff]
        %v327 = vld [vmem:[#allocation5 + $0x20] sm:$0xff]
        %v328 = vld [vmem:[#allocation5 + $0x28] sm:$0xff]
        %v329 = vld [vmem:[#allocation5 + $0x30] sm:$0xff]
        %v330 = vld [vmem:[#allocation5 + $0x38] sm:$0xff]
        %v331 = vld [vmem:[#allocation5 + $0x40] sm:$0xff]
        %v332 = vld [vmem:[#allocation5 + $0x48] sm:$0xff]
        %v333 = vld [vmem:[#allocation5 + $0x50] sm:$0xff]
        %v334 = vld [vmem:[#allocation5 + $0x58] sm:$0xff]
        %v335 = vld [vmem:[#allocation5 + $0x60] sm:$0xff]
        %v336 = vld [vmem:[#allocation5 + $0x68] sm:$0xff]
        %v337 = vld [vmem:[#allocation5 + $0x70] sm:$0xff]
        %v338 = vld [vmem:[#allocation5 + $0x78] sm:$0xff]
        %v339 = vld [vmem:[%s2] sm:$0x3]
        %v341 = vlaneseq
        %v342 = vshrl.u32 %v341, 7
        %v343 = vsub.s32 0, %v342
        %v344 = vrot.slane %v339, %v343
        %v345 = vlaneseq
        %v346 = vshrl.u32 %v345, 7
        %v347 = vsub.s32 1, %v346
        %v348 = vrot.slane %v339, %v347
        %v367 = vunpack.c.l.b16 %v323
        %v368 = vunpack.c.h.b16 %v323
        %v369 = vunpack.c.l.b16 %v324
        %v370 = vunpack.c.h.b16 %v324
        %v371 = vunpack.c.l.b16 %v325
        %v372 = vunpack.c.h.b16 %v325
        %v373 = vunpack.c.l.b16 %v326
        %v374 = vunpack.c.h.b16 %v326
        %v375 = vunpack.c.l.b16 %v327
        %v376 = vunpack.c.h.b16 %v327
        %v377 = vunpack.c.l.b16 %v328
        %v378 = vunpack.c.h.b16 %v328
        %v379 = vunpack.c.l.b16 %v329
        %v380 = vunpack.c.h.b16 %v329
        %v381 = vunpack.c.l.b16 %v330
        %v382 = vunpack.c.h.b16 %v330
        %v383 = vunpack.c.l.b16 %v331
        %v384 = vunpack.c.h.b16 %v331
        %v385 = vunpack.c.l.b16 %v332
        %v386 = vunpack.c.h.b16 %v332
        %v387 = vunpack.c.l.b16 %v333
        %v388 = vunpack.c.h.b16 %v333
        %v389 = vunpack.c.l.b16 %v334
        %v390 = vunpack.c.h.b16 %v334
        %v391 = vunpack.c.l.b16 %v335
        %v392 = vunpack.c.h.b16 %v335
        %v393 = vunpack.c.l.b16 %v336
        %v394 = vunpack.c.h.b16 %v336
        %v395 = vunpack.c.l.b16 %v337
        %v396 = vunpack.c.h.b16 %v337
        %v397 = vunpack.c.l.b16 %v338
        %v398 = vunpack.c.h.b16 %v338
        %v399 = vpack.c.b16 %v369, %v367
        %v400 = vpack.c.b16 %v370, %v368
        %v401 = vpack.c.b16 %v373, %v371
        %v402 = vpack.c.b16 %v374, %v372
        %v403 = vpack.c.b16 %v377, %v375
        %v404 = vpack.c.b16 %v378, %v376
        %v405 = vpack.c.b16 %v381, %v379
        %v406 = vpack.c.b16 %v382, %v380
        %v407 = vpack.c.b16 %v385, %v383
        %v408 = vpack.c.b16 %v386, %v384
        %v409 = vpack.c.b16 %v389, %v387
        %v410 = vpack.c.b16 %v390, %v388
        %v411 = vpack.c.b16 %v393, %v391
        %v412 = vpack.c.b16 %v394, %v392
        %v413 = vpack.c.b16 %v397, %v395
        %v414 = vpack.c.b16 %v398, %v396
        %431 = vmatprep.subr.bf16.mxu0 %v400
        %432 = vmatpush1.bf16.msra.mxu0 %v399
        %433 = vmatprep.subr.bf16.mxu0 %v402
        %434 = vmatpush1.bf16.msra.mxu0 %v401
        %435 = vmatprep.subr.bf16.mxu0 %v404
        %436 = vmatpush1.bf16.msra.mxu0 %v403
        %437 = vmatprep.subr.bf16.mxu0 %v406
        %438 = vmatpush1.bf16.msra.mxu0 %v405
        %439 = vmatprep.subr.bf16.mxu0 %v408
        %440 = vmatpush1.bf16.msra.mxu0 %v407
        %441 = vmatprep.subr.bf16.mxu0 %v410
        %442 = vmatpush1.bf16.msra.mxu0 %v409
        %443 = vmatprep.subr.bf16.mxu0 %v412
        %444 = vmatpush1.bf16.msra.mxu0 %v411
        %445 = vmatprep.subr.bf16.mxu0 %v414
        %446 = vmatpush1.bf16.msra.mxu0 %v413
        %447 = vmatprep.subr.bf16.mxu0 0
        %448 = vmatpush1.bf16.msra.mxu0 0
        %449 = vmatprep.subr.bf16.mxu0 0
        %450 = vmatpush1.bf16.msra.mxu0 0
        %451 = vmatprep.subr.bf16.mxu0 0
        %452 = vmatpush1.bf16.msra.mxu0 0
        %453 = vmatprep.subr.bf16.mxu0 0
        %454 = vmatpush1.bf16.msra.mxu0 0
        %455 = vmatprep.subr.bf16.mxu0 0
        %456 = vmatpush1.bf16.msra.mxu0 0
        %457 = vmatprep.subr.bf16.mxu0 0
        %458 = vmatpush1.bf16.msra.mxu0 0
        %459 = vmatprep.subr.bf16.mxu0 0
        %460 = vmatpush1.bf16.msra.mxu0 0
        %461 = vmatprep.subr.bf16.mxu0 0
        %462 = vmatpush1.bf16.msra.mxu0 0
        %463 = vmatprep.mubr.bf16.mxu0 0
        %464 = vmatmul.mubr.bf16.gmra.mrb[0].mxu0 %v307
        %v465 = vpop.f32.mrb[0].mxu0
        %v466 = vadd.f32 %v344, %v465
        %v467 = vpop.f32.mrb[0].mxu0
        %v468 = vadd.f32 %v348, %v467
        %v469 = vpop.f32.mrb[0].mxu0
        %v470 = vadd.f32 %v344, %v469
        %v471 = vpop.f32.mrb[0].mxu0
        %v472 = vadd.f32 %v348, %v471
        %473 = vmatprep.mubr.bf16.mxu0 0
        %474 = vmatmul.mubr.bf16.gmra.mrb[0].mxu0 %v308
        %v475 = vpop.f32.mrb[0].mxu0
        %v476 = vadd.f32 %v344, %v475
        %v477 = vpop.f32.mrb[0].mxu0
        %v478 = vadd.f32 %v348, %v477
        %v479 = vpop.f32.mrb[0].mxu0
        %v480 = vadd.f32 %v344, %v479
        %v481 = vpop.f32.mrb[0].mxu0
        %v482 = vadd.f32 %v348, %v481
        %483 = vmatprep.mubr.bf16.mxu0 0
        %484 = vmatmul.mubr.bf16.gmra.mrb[0].mxu0 %v309
        %v485 = vpop.f32.mrb[0].mxu0
        %v486 = vadd.f32 %v344, %v485
        %v487 = vpop.f32.mrb[0].mxu0
        %v488 = vadd.f32 %v348, %v487
        %v489 = vpop.f32.mrb[0].mxu0
        %v490 = vadd.f32 %v344, %v489
        %v491 = vpop.f32.mrb[0].mxu0
        %v492 = vadd.f32 %v348, %v491
        %493 = vmatprep.mubr.bf16.mxu0 0
        %494 = vmatmul.mubr.bf16.gmra.mrb[0].mxu0 %v310
        %v495 = vpop.f32.mrb[0].mxu0
        %v496 = vadd.f32 %v344, %v495
        %v497 = vpop.f32.mrb[0].mxu0
        %v498 = vadd.f32 %v348, %v497
        %v499 = vpop.f32.mrb[0].mxu0
        %v500 = vadd.f32 %v344, %v499
        %v501 = vpop.f32.mrb[0].mxu0
        %v502 = vadd.f32 %v348, %v501
        %503 = vmatprep.mubr.bf16.mxu0 0
        %504 = vmatmul.mubr.bf16.gmra.mrb[0].mxu0 %v311
        %v505 = vpop.f32.mrb[0].mxu0
        %v506 = vadd.f32 %v344, %v505
        %v507 = vpop.f32.mrb[0].mxu0
        %v508 = vadd.f32 %v348, %v507
        %v509 = vpop.f32.mrb[0].mxu0
        %v510 = vadd.f32 %v344, %v509
        %v511 = vpop.f32.mrb[0].mxu0
        %v512 = vadd.f32 %v348, %v511
        %513 = vmatprep.mubr.bf16.mxu0 0
        %514 = vmatmul.mubr.bf16.gmra.mrb[0].mxu0 %v312
        %v515 = vpop.f32.mrb[0].mxu0
        %v516 = vadd.f32 %v344, %v515
        %v517 = vpop.f32.mrb[0].mxu0
        %v518 = vadd.f32 %v348, %v517
        %v519 = vpop.f32.mrb[0].mxu0
        %v520 = vadd.f32 %v344, %v519
        %v521 = vpop.f32.mrb[0].mxu0
        %v522 = vadd.f32 %v348, %v521
        %523 = vmatprep.mubr.bf16.mxu0 0
        %524 = vmatmul.mubr.bf16.gmra.mrb[0].mxu0 %v313
        %v525 = vpop.f32.mrb[0].mxu0
        %v526 = vadd.f32 %v344, %v525
        %v527 = vpop.f32.mrb[0].mxu0
        %v528 = vadd.f32 %v348, %v527
        %v529 = vpop.f32.mrb[0].mxu0
        %v530 = vadd.f32 %v344, %v529
        %v531 = vpop.f32.mrb[0].mxu0
        %v532 = vadd.f32 %v348, %v531
        %533 = vmatprep.mubr.bf16.mxu0 0
        %534 = vmatmul.mubr.bf16.gmra.mrb[0].mxu0 %v314
        %v535 = vpop.f32.mrb[0].mxu0
        %v536 = vadd.f32 %v344, %v535
        %v537 = vpop.f32.mrb[0].mxu0
        %v538 = vadd.f32 %v348, %v537
        %v539 = vpop.f32.mrb[0].mxu0
        %v540 = vadd.f32 %v344, %v539
        %v541 = vpop.f32.mrb[0].mxu0
        %v542 = vadd.f32 %v348, %v541
        %543 = vmatprep.mubr.bf16.mxu0 0
        %544 = vmatmul.mubr.bf16.gmra.mrb[0].mxu0 %v315
        %v545 = vpop.f32.mrb[0].mxu0
        %v546 = vadd.f32 %v344, %v545
        %v547 = vpop.f32.mrb[0].mxu0
        %v548 = vadd.f32 %v348, %v547
        %v549 = vpop.f32.mrb[0].mxu0
        %v550 = vadd.f32 %v344, %v549
        %v551 = vpop.f32.mrb[0].mxu0
        %v552 = vadd.f32 %v348, %v551
        %553 = vmatprep.mubr.bf16.mxu0 0
        %554 = vmatmul.mubr.bf16.gmra.mrb[0].mxu0 %v316
        %v555 = vpop.f32.mrb[0].mxu0
        %v556 = vadd.f32 %v344, %v555
        %v557 = vpop.f32.mrb[0].mxu0
        %v558 = vadd.f32 %v348, %v557
        %v559 = vpop.f32.mrb[0].mxu0
        %v560 = vadd.f32 %v344, %v559
        %v561 = vpop.f32.mrb[0].mxu0
        %v562 = vadd.f32 %v348, %v561
        %563 = vmatprep.mubr.bf16.mxu0 0
        %564 = vmatmul.mubr.bf16.gmra.mrb[0].mxu0 %v317
        %v565 = vpop.f32.mrb[0].mxu0
        %v566 = vadd.f32 %v344, %v565
        %v567 = vpop.f32.mrb[0].mxu0
        %v568 = vadd.f32 %v348, %v567
        %v569 = vpop.f32.mrb[0].mxu0
        %v570 = vadd.f32 %v344, %v569
        %v571 = vpop.f32.mrb[0].mxu0
        %v572 = vadd.f32 %v348, %v571
        %573 = vmatprep.mubr.bf16.mxu0 0
        %574 = vmatmul.mubr.bf16.gmra.mrb[0].mxu0 %v318
        %v575 = vpop.f32.mrb[0].mxu0
        %v576 = vadd.f32 %v344, %v575
        %v577 = vpop.f32.mrb[0].mxu0
        %v578 = vadd.f32 %v348, %v577
        %v579 = vpop.f32.mrb[0].mxu0
        %v580 = vadd.f32 %v344, %v579
        %v581 = vpop.f32.mrb[0].mxu0
        %v582 = vadd.f32 %v348, %v581
        %583 = vmatprep.mubr.bf16.mxu0 0
        %584 = vmatmul.mubr.bf16.gmra.mrb[0].mxu0 %v319
        %v585 = vpop.f32.mrb[0].mxu0
        %v586 = vadd.f32 %v344, %v585
        %v587 = vpop.f32.mrb[0].mxu0
        %v588 = vadd.f32 %v348, %v587
        %v589 = vpop.f32.mrb[0].mxu0
        %v590 = vadd.f32 %v344, %v589
        %v591 = vpop.f32.mrb[0].mxu0
        %v592 = vadd.f32 %v348, %v591
        %593 = vmatprep.mubr.bf16.mxu0 0
        %594 = vmatmul.mubr.bf16.gmra.mrb[0].mxu0 %v320
        %v595 = vpop.f32.mrb[0].mxu0
        %v596 = vadd.f32 %v344, %v595
        %v597 = vpop.f32.mrb[0].mxu0
        %v598 = vadd.f32 %v348, %v597
        %v599 = vpop.f32.mrb[0].mxu0
        %v600 = vadd.f32 %v344, %v599
        %v601 = vpop.f32.mrb[0].mxu0
        %v602 = vadd.f32 %v348, %v601
        %603 = vmatprep.mubr.bf16.mxu0 0
        %604 = vmatmul.mubr.bf16.gmra.mrb[0].mxu0 %v321
        %v605 = vpop.f32.mrb[0].mxu0
        %v606 = vadd.f32 %v344, %v605
        %v607 = vpop.f32.mrb[0].mxu0
        %v608 = vadd.f32 %v348, %v607
        %v609 = vpop.f32.mrb[0].mxu0
        %v610 = vadd.f32 %v344, %v609
        %v611 = vpop.f32.mrb[0].mxu0
        %v612 = vadd.f32 %v348, %v611
        %613 = vmatprep.mubr.bf16.mxu0 0
        %614 = vmatmul.mubr.bf16.gmra.mrb[0].mxu0 %v322
        %v615 = vpop.f32.mrb[0].mxu0
        %v616 = vadd.f32 %v344, %v615
        %v617 = vpop.f32.mrb[0].mxu0
        %v618 = vadd.f32 %v348, %v617
        %v619 = vpop.f32.mrb[0].mxu0
        %v620 = vadd.f32 %v344, %v619
        %v621 = vpop.f32.mrb[0].mxu0
        %v622 = vadd.f32 %v348, %v621
        %623 = vdwg.mxu0
        %v624 = vmul.f32 %v466, 0.5
        %v625 = vmul.f32 %v468, 0.5
        %v626 = vmul.f32 %v470, 0.5
        %v627 = vmul.f32 %v472, 0.5
        %v628 = vmul.f32 %v476, 0.5
        %v629 = vmul.f32 %v478, 0.5
        %v630 = vmul.f32 %v480, 0.5
        %v631 = vmul.f32 %v482, 0.5
        %v632 = vmul.f32 %v486, 0.5
        %v633 = vmul.f32 %v488, 0.5
        %v634 = vmul.f32 %v490, 0.5
        %v635 = vmul.f32 %v492, 0.5
        %v636 = vmul.f32 %v496, 0.5
        %v637 = vmul.f32 %v498, 0.5
        %v638 = vmul.f32 %v500, 0.5
        %v639 = vmul.f32 %v502, 0.5
        %v640 = vmul.f32 %v506, 0.5
        %v641 = vmul.f32 %v508, 0.5
        %v642 = vmul.f32 %v510, 0.5
        %v643 = vmul.f32 %v512, 0.5
        %v644 = vmul.f32 %v516, 0.5
        %v645 = vmul.f32 %v518, 0.5
        %v646 = vmul.f32 %v520, 0.5
        %v647 = vmul.f32 %v522, 0.5
        %v648 = vmul.f32 %v526, 0.5
        %v649 = vmul.f32 %v528, 0.5
        %v650 = vmul.f32 %v530, 0.5
        %v651 = vmul.f32 %v532, 0.5
        %v652 = vmul.f32 %v536, 0.5
        %v653 = vmul.f32 %v538, 0.5
        %v654 = vmul.f32 %v540, 0.5
        %v655 = vmul.f32 %v542, 0.5
        %v656 = vmul.f32 %v546, 0.5
        %v657 = vmul.f32 %v548, 0.5
        %v658 = vmul.f32 %v550, 0.5
        %v659 = vmul.f32 %v552, 0.5
        %v660 = vmul.f32 %v556, 0.5
        %v661 = vmul.f32 %v558, 0.5
        %v662 = vmul.f32 %v560, 0.5
        %v663 = vmul.f32 %v562, 0.5
        %v664 = vmul.f32 %v566, 0.5
        %v665 = vmul.f32 %v568, 0.5
        %v666 = vmul.f32 %v570, 0.5
        %v667 = vmul.f32 %v572, 0.5
        %v668 = vmul.f32 %v576, 0.5
        %v669 = vmul.f32 %v578, 0.5
        %v670 = vmul.f32 %v580, 0.5
        %v671 = vmul.f32 %v582, 0.5
        %v672 = vmul.f32 %v586, 0.5
        %v673 = vmul.f32 %v588, 0.5
        %v674 = vmul.f32 %v590, 0.5
        %v675 = vmul.f32 %v592, 0.5
        %v676 = vmul.f32 %v596, 0.5
        %v677 = vmul.f32 %v598, 0.5
        %v678 = vmul.f32 %v600, 0.5
        %v679 = vmul.f32 %v602, 0.5
        %v680 = vmul.f32 %v606, 0.5
        %v681 = vmul.f32 %v608, 0.5
        %v682 = vmul.f32 %v610, 0.5
        %v683 = vmul.f32 %v612, 0.5
        %v684 = vmul.f32 %v616, 0.5
        %v685 = vmul.f32 %v618, 0.5
        %v686 = vmul.f32 %v620, 0.5
        %v687 = vmul.f32 %v622, 0.5
        %v688 = vmul.f32 %v466, 0.70710677
        %v689 = vmul.f32 %v468, 0.70710677
        %v690 = vmul.f32 %v470, 0.70710677
        %v691 = vmul.f32 %v472, 0.70710677
        %v692 = vmul.f32 %v476, 0.70710677
        %v693 = vmul.f32 %v478, 0.70710677
        %v694 = vmul.f32 %v480, 0.70710677
        %v695 = vmul.f32 %v482, 0.70710677
        %v696 = vmul.f32 %v486, 0.70710677
        %v697 = vmul.f32 %v488, 0.70710677
        %v698 = vmul.f32 %v490, 0.70710677
        %v699 = vmul.f32 %v492, 0.70710677
        %v700 = vmul.f32 %v496, 0.70710677
        %v701 = vmul.f32 %v498, 0.70710677
        %v702 = vmul.f32 %v500, 0.70710677
        %v703 = vmul.f32 %v502, 0.70710677
        %v704 = vmul.f32 %v506, 0.70710677
        %v705 = vmul.f32 %v508, 0.70710677
        %v706 = vmul.f32 %v510, 0.70710677
        %v707 = vmul.f32 %v512, 0.70710677
        %v708 = vmul.f32 %v516, 0.70710677
        %v709 = vmul.f32 %v518, 0.70710677
        %v710 = vmul.f32 %v520, 0.70710677
        %v711 = vmul.f32 %v522, 0.70710677
        %v712 = vmul.f32 %v526, 0.70710677
        %v713 = vmul.f32 %v528, 0.70710677
        %v714 = vmul.f32 %v530, 0.70710677
        %v715 = vmul.f32 %v532, 0.70710677
        %v716 = vmul.f32 %v536, 0.70710677
        %v717 = vmul.f32 %v538, 0.70710677
        %v718 = vmul.f32 %v540, 0.70710677
        %v719 = vmul.f32 %v542, 0.70710677
        %v720 = vmul.f32 %v546, 0.70710677
        %v721 = vmul.f32 %v548, 0.70710677
        %v722 = vmul.f32 %v550, 0.70710677
        %v723 = vmul.f32 %v552, 0.70710677
        %v724 = vmul.f32 %v556, 0.70710677
        %v725 = vmul.f32 %v558, 0.70710677
        %v726 = vmul.f32 %v560, 0.70710677
        %v727 = vmul.f32 %v562, 0.70710677
        %v728 = vmul.f32 %v566, 0.70710677
        %v729 = vmul.f32 %v568, 0.70710677
        %v730 = vmul.f32 %v570, 0.70710677
        %v731 = vmul.f32 %v572, 0.70710677
        %v732 = vmul.f32 %v576, 0.70710677
        %v733 = vmul.f32 %v578, 0.70710677
        %v734 = vmul.f32 %v580, 0.70710677
        %v735 = vmul.f32 %v582, 0.70710677
        %v736 = vmul.f32 %v586, 0.70710677
        %v737 = vmul.f32 %v588, 0.70710677
        %v738 = vmul.f32 %v590, 0.70710677
        %v739 = vmul.f32 %v592, 0.70710677
        %v740 = vmul.f32 %v596, 0.70710677
        %v741 = vmul.f32 %v598, 0.70710677
        %v742 = vmul.f32 %v600, 0.70710677
        %v743 = vmul.f32 %v602, 0.70710677
        %v744 = vmul.f32 %v606, 0.70710677
        %v745 = vmul.f32 %v608, 0.70710677
        %v746 = vmul.f32 %v610, 0.70710677
        %v747 = vmul.f32 %v612, 0.70710677
        %v748 = vmul.f32 %v616, 0.70710677
        %v749 = vmul.f32 %v618, 0.70710677
        %v750 = vmul.f32 %v620, 0.70710677
        %v751 = vmul.f32 %v622, 0.70710677
        %v752 = vand.u32 2147483647, %v688
        %v753 = vand.u32 2147483647, %v689
        %v754 = vand.u32 2147483647, %v690
        %v755 = vand.u32 2147483647, %v691
        %v756 = vand.u32 2147483647, %v692
        %v757 = vand.u32 2147483647, %v693
        %v758 = vand.u32 2147483647, %v694
        %v759 = vand.u32 2147483647, %v695
        %v760 = vand.u32 2147483647, %v696
        %v761 = vand.u32 2147483647, %v697
        %v762 = vand.u32 2147483647, %v698
        %v763 = vand.u32 2147483647, %v699
        %v764 = vand.u32 2147483647, %v700
        %v765 = vand.u32 2147483647, %v701
        %v766 = vand.u32 2147483647, %v702
        %v767 = vand.u32 2147483647, %v703
        %v768 = vand.u32 2147483647, %v704
        %v769 = vand.u32 2147483647, %v705
        %v770 = vand.u32 2147483647, %v706
        %v771 = vand.u32 2147483647, %v707
        %v772 = vand.u32 2147483647, %v708
        %v773 = vand.u32 2147483647, %v709
        %v774 = vand.u32 2147483647, %v710
        %v775 = vand.u32 2147483647, %v711
        %v776 = vand.u32 2147483647, %v712
        %v777 = vand.u32 2147483647, %v713
        %v778 = vand.u32 2147483647, %v714
        %v779 = vand.u32 2147483647, %v715
        %v780 = vand.u32 2147483647, %v716
        %v781 = vand.u32 2147483647, %v717
        %v782 = vand.u32 2147483647, %v718
        %v783 = vand.u32 2147483647, %v719
        %v784 = vand.u32 2147483647, %v720
        %v785 = vand.u32 2147483647, %v721
        %v786 = vand.u32 2147483647, %v722
        %v787 = vand.u32 2147483647, %v723
        %v788 = vand.u32 2147483647, %v724
        %v789 = vand.u32 2147483647, %v725
        %v790 = vand.u32 2147483647, %v726
        %v791 = vand.u32 2147483647, %v727
        %v792 = vand.u32 2147483647, %v728
        %v793 = vand.u32 2147483647, %v729
        %v794 = vand.u32 2147483647, %v730
        %v795 = vand.u32 2147483647, %v731
        %v796 = vand.u32 2147483647, %v732
        %v797 = vand.u32 2147483647, %v733
        %v798 = vand.u32 2147483647, %v734
        %v799 = vand.u32 2147483647, %v735
        %v800 = vand.u32 2147483647, %v736
        %v801 = vand.u32 2147483647, %v737
        %v802 = vand.u32 2147483647, %v738
        %v803 = vand.u32 2147483647, %v739
        %v804 = vand.u32 2147483647, %v740
        %v805 = vand.u32 2147483647, %v741
        %v806 = vand.u32 2147483647, %v742
        %v807 = vand.u32 2147483647, %v743
        %v808 = vand.u32 2147483647, %v744
        %v809 = vand.u32 2147483647, %v745
        %v810 = vand.u32 2147483647, %v746
        %v811 = vand.u32 2147483647, %v747
        %v812 = vand.u32 2147483647, %v748
        %v813 = vand.u32 2147483647, %v749
        %v814 = vand.u32 2147483647, %v750
        %v815 = vand.u32 2147483647, %v751
        %v816 = vmul.f32 %v752, 0.3275911
        %v817 = vmul.f32 %v753, 0.3275911
        %v818 = vmul.f32 %v754, 0.3275911
        %v819 = vmul.f32 %v755, 0.3275911
        %v820 = vmul.f32 %v756, 0.3275911
        %v821 = vmul.f32 %v757, 0.3275911
        %v822 = vmul.f32 %v758, 0.3275911
        %v823 = vmul.f32 %v759, 0.3275911
        %v824 = vmul.f32 %v760, 0.3275911
        %v825 = vmul.f32 %v761, 0.3275911
        %v826 = vmul.f32 %v762, 0.3275911
        %v827 = vmul.f32 %v763, 0.3275911
        %v828 = vmul.f32 %v764, 0.3275911
        %v829 = vmul.f32 %v765, 0.3275911
        %v830 = vmul.f32 %v766, 0.3275911
        %v831 = vmul.f32 %v767, 0.3275911
        %v832 = vmul.f32 %v768, 0.3275911
        %v833 = vmul.f32 %v769, 0.3275911
        %v834 = vmul.f32 %v770, 0.3275911
        %v835 = vmul.f32 %v771, 0.3275911
        %v836 = vmul.f32 %v772, 0.3275911
        %v837 = vmul.f32 %v773, 0.3275911
        %v838 = vmul.f32 %v774, 0.3275911
        %v839 = vmul.f32 %v775, 0.3275911
        %v840 = vmul.f32 %v776, 0.3275911
        %v841 = vmul.f32 %v777, 0.3275911
        %v842 = vmul.f32 %v778, 0.3275911
        %v843 = vmul.f32 %v779, 0.3275911
        %v844 = vmul.f32 %v780, 0.3275911
        %v845 = vmul.f32 %v781, 0.3275911
        %v846 = vmul.f32 %v782, 0.3275911
        %v847 = vmul.f32 %v783, 0.3275911
        %v848 = vmul.f32 %v784, 0.3275911
        %v849 = vmul.f32 %v785, 0.3275911
        %v850 = vmul.f32 %v786, 0.3275911
        %v851 = vmul.f32 %v787, 0.3275911
        %v852 = vmul.f32 %v788, 0.3275911
        %v853 = vmul.f32 %v789, 0.3275911
        %v854 = vmul.f32 %v790, 0.3275911
        %v855 = vmul.f32 %v791, 0.3275911
        %v856 = vmul.f32 %v792, 0.3275911
        %v857 = vmul.f32 %v793, 0.3275911
        %v858 = vmul.f32 %v794, 0.3275911
        %v859 = vmul.f32 %v795, 0.3275911
        %v860 = vmul.f32 %v796, 0.3275911
        %v861 = vmul.f32 %v797, 0.3275911
        %v862 = vmul.f32 %v798, 0.3275911
        %v863 = vmul.f32 %v799, 0.3275911
        %v864 = vmul.f32 %v800, 0.3275911
        %v865 = vmul.f32 %v801, 0.3275911
        %v866 = vmul.f32 %v802, 0.3275911
        %v867 = vmul.f32 %v803, 0.3275911
        %v868 = vmul.f32 %v804, 0.3275911
        %v869 = vmul.f32 %v805, 0.3275911
        %v870 = vmul.f32 %v806, 0.3275911
        %v871 = vmul.f32 %v807, 0.3275911
        %v872 = vmul.f32 %v808, 0.3275911
        %v873 = vmul.f32 %v809, 0.3275911
        %v874 = vmul.f32 %v810, 0.3275911
        %v875 = vmul.f32 %v811, 0.3275911
        %v876 = vmul.f32 %v812, 0.3275911
        %v877 = vmul.f32 %v813, 0.3275911
        %v878 = vmul.f32 %v814, 0.3275911
        %v879 = vmul.f32 %v815, 0.3275911
        %v880 = vadd.f32 %v816, 1.0
        %v881 = vadd.f32 %v817, 1.0
        %v882 = vadd.f32 %v818, 1.0
        %v883 = vadd.f32 %v819, 1.0
        %v884 = vadd.f32 %v820, 1.0
        %v885 = vadd.f32 %v821, 1.0
        %v886 = vadd.f32 %v822, 1.0
        %v887 = vadd.f32 %v823, 1.0
        %v888 = vadd.f32 %v824, 1.0
        %v889 = vadd.f32 %v825, 1.0
        %v890 = vadd.f32 %v826, 1.0
        %v891 = vadd.f32 %v827, 1.0
        %v892 = vadd.f32 %v828, 1.0
        %v893 = vadd.f32 %v829, 1.0
        %v894 = vadd.f32 %v830, 1.0
        %v895 = vadd.f32 %v831, 1.0
        %v896 = vadd.f32 %v832, 1.0
        %v897 = vadd.f32 %v833, 1.0
        %v898 = vadd.f32 %v834, 1.0
        %v899 = vadd.f32 %v835, 1.0
        %v900 = vadd.f32 %v836, 1.0
        %v901 = vadd.f32 %v837, 1.0
        %v902 = vadd.f32 %v838, 1.0
        %v903 = vadd.f32 %v839, 1.0
        %v904 = vadd.f32 %v840, 1.0
        %v905 = vadd.f32 %v841, 1.0
        %v906 = vadd.f32 %v842, 1.0
        %v907 = vadd.f32 %v843, 1.0
        %v908 = vadd.f32 %v844, 1.0
        %v909 = vadd.f32 %v845, 1.0
        %v910 = vadd.f32 %v846, 1.0
        %v911 = vadd.f32 %v847, 1.0
        %v912 = vadd.f32 %v848, 1.0
        %v913 = vadd.f32 %v849, 1.0
        %v914 = vadd.f32 %v850, 1.0
        %v915 = vadd.f32 %v851, 1.0
        %v916 = vadd.f32 %v852, 1.0
        %v917 = vadd.f32 %v853, 1.0
        %v918 = vadd.f32 %v854, 1.0
        %v919 = vadd.f32 %v855, 1.0
        %v920 = vadd.f32 %v856, 1.0
        %v921 = vadd.f32 %v857, 1.0
        %v922 = vadd.f32 %v858, 1.0
        %v923 = vadd.f32 %v859, 1.0
        %v924 = vadd.f32 %v860, 1.0
        %v925 = vadd.f32 %v861, 1.0
        %v926 = vadd.f32 %v862, 1.0
        %v927 = vadd.f32 %v863, 1.0
        %v928 = vadd.f32 %v864, 1.0
        %v929 = vadd.f32 %v865, 1.0
        %v930 = vadd.f32 %v866, 1.0
        %v931 = vadd.f32 %v867, 1.0
        %v932 = vadd.f32 %v868, 1.0
        %v933 = vadd.f32 %v869, 1.0
        %v934 = vadd.f32 %v870, 1.0
        %v935 = vadd.f32 %v871, 1.0
        %v936 = vadd.f32 %v872, 1.0
        %v937 = vadd.f32 %v873, 1.0
        %v938 = vadd.f32 %v874, 1.0
        %v939 = vadd.f32 %v875, 1.0
        %v940 = vadd.f32 %v876, 1.0
        %v941 = vadd.f32 %v877, 1.0
        %v942 = vadd.f32 %v878, 1.0
        %v943 = vadd.f32 %v879, 1.0
        %v944 = vrcp.pop %v880
        %v945 = vrcp.pop %v881
        %v946 = vrcp.pop %v882
        %v947 = vrcp.pop %v883
        %v948 = vrcp.pop %v884
        %v949 = vrcp.pop %v885
        %v950 = vrcp.pop %v886
        %v951 = vrcp.pop %v887
        %v952 = vrcp.pop %v888
        %v953 = vrcp.pop %v889
        %v954 = vrcp.pop %v890
        %v955 = vrcp.pop %v891
        %v956 = vrcp.pop %v892
        %v957 = vrcp.pop %v893
        %v958 = vrcp.pop %v894
        %v959 = vrcp.pop %v895
        %v960 = vrcp.pop %v896
        %v961 = vrcp.pop %v897
        %v962 = vrcp.pop %v898
        %v963 = vrcp.pop %v899
        %v964 = vrcp.pop %v900
        %v965 = vrcp.pop %v901
        %v966 = vrcp.pop %v902
        %v967 = vrcp.pop %v903
        %v968 = vrcp.pop %v904
        %v969 = vrcp.pop %v905
        %v970 = vrcp.pop %v906
        %v971 = vrcp.pop %v907
        %v972 = vrcp.pop %v908
        %v973 = vrcp.pop %v909
        %v974 = vrcp.pop %v910
        %v975 = vrcp.pop %v911
        %v976 = vrcp.pop %v912
        %v977 = vrcp.pop %v913
        %v978 = vrcp.pop %v914
        %v979 = vrcp.pop %v915
        %v980 = vrcp.pop %v916
        %v981 = vrcp.pop %v917
        %v982 = vrcp.pop %v918
        %v983 = vrcp.pop %v919
        %v984 = vrcp.pop %v920
        %v985 = vrcp.pop %v921
        %v986 = vrcp.pop %v922
        %v987 = vrcp.pop %v923
        %v988 = vrcp.pop %v924
        %v989 = vrcp.pop %v925
        %v990 = vrcp.pop %v926
        %v991 = vrcp.pop %v927
        %v992 = vrcp.pop %v928
        %v993 = vrcp.pop %v929
        %v994 = vrcp.pop %v930
        %v995 = vrcp.pop %v931
        %v996 = vrcp.pop %v932
        %v997 = vrcp.pop %v933
        %v998 = vrcp.pop %v934
        %v999 = vrcp.pop %v935
        %v1000 = vrcp.pop %v936
        %v1001 = vrcp.pop %v937
        %v1002 = vrcp.pop %v938
        %v1003 = vrcp.pop %v939
        %v1004 = vrcp.pop %v940
        %v1005 = vrcp.pop %v941
        %v1006 = vrcp.pop %v942
        %v1007 = vrcp.pop %v943
        %v1008 = vmul.f32 %v944, 1.0614054
        %v1009 = vmul.f32 %v945, 1.0614054
        %v1010 = vmul.f32 %v946, 1.0614054
        %v1011 = vmul.f32 %v947, 1.0614054
        %v1012 = vmul.f32 %v948, 1.0614054
        %v1013 = vmul.f32 %v949, 1.0614054
        %v1014 = vmul.f32 %v950, 1.0614054
        %v1015 = vmul.f32 %v951, 1.0614054
        %v1016 = vmul.f32 %v952, 1.0614054
        %v1017 = vmul.f32 %v953, 1.0614054
        %v1018 = vmul.f32 %v954, 1.0614054
        %v1019 = vmul.f32 %v955, 1.0614054
        %v1020 = vmul.f32 %v956, 1.0614054
        %v1021 = vmul.f32 %v957, 1.0614054
        %v1022 = vmul.f32 %v958, 1.0614054
        %v1023 = vmul.f32 %v959, 1.0614054
        %v1024 = vmul.f32 %v960, 1.0614054
        %v1025 = vmul.f32 %v961, 1.0614054
        %v1026 = vmul.f32 %v962, 1.0614054
        %v1027 = vmul.f32 %v963, 1.0614054
        %v1028 = vmul.f32 %v964, 1.0614054
        %v1029 = vmul.f32 %v965, 1.0614054
        %v1030 = vmul.f32 %v966, 1.0614054
        %v1031 = vmul.f32 %v967, 1.0614054
        %v1032 = vmul.f32 %v968, 1.0614054
        %v1033 = vmul.f32 %v969, 1.0614054
        %v1034 = vmul.f32 %v970, 1.0614054
        %v1035 = vmul.f32 %v971, 1.0614054
        %v1036 = vmul.f32 %v972, 1.0614054
        %v1037 = vmul.f32 %v973, 1.0614054
        %v1038 = vmul.f32 %v974, 1.0614054
        %v1039 = vmul.f32 %v975, 1.0614054
        %v1040 = vmul.f32 %v976, 1.0614054
        %v1041 = vmul.f32 %v977, 1.0614054
        %v1042 = vmul.f32 %v978, 1.0614054
        %v1043 = vmul.f32 %v979, 1.0614054
        %v1044 = vmul.f32 %v980, 1.0614054
        %v1045 = vmul.f32 %v981, 1.0614054
        %v1046 = vmul.f32 %v982, 1.0614054
        %v1047 = vmul.f32 %v983, 1.0614054
        %v1048 = vmul.f32 %v984, 1.0614054
        %v1049 = vmul.f32 %v985, 1.0614054
        %v1050 = vmul.f32 %v986, 1.0614054
        %v1051 = vmul.f32 %v987, 1.0614054
        %v1052 = vmul.f32 %v988, 1.0614054
        %v1053 = vmul.f32 %v989, 1.0614054
        %v1054 = vmul.f32 %v990, 1.0614054
        %v1055 = vmul.f32 %v991, 1.0614054
        %v1056 = vmul.f32 %v992, 1.0614054
        %v1057 = vmul.f32 %v993, 1.0614054
        %v1058 = vmul.f32 %v994, 1.0614054
        %v1059 = vmul.f32 %v995, 1.0614054
        %v1060 = vmul.f32 %v996, 1.0614054
        %v1061 = vmul.f32 %v997, 1.0614054
        %v1062 = vmul.f32 %v998, 1.0614054
        %v1063 = vmul.f32 %v999, 1.0614054
        %v1064 = vmul.f32 %v1000, 1.0614054
        %v1065 = vmul.f32 %v1001, 1.0614054
        %v1066 = vmul.f32 %v1002, 1.0614054
        %v1067 = vmul.f32 %v1003, 1.0614054
        %v1068 = vmul.f32 %v1004, 1.0614054
        %v1069 = vmul.f32 %v1005, 1.0614054
        %v1070 = vmul.f32 %v1006, 1.0614054
        %v1071 = vmul.f32 %v1007, 1.0614054
        %v1072 = vadd.f32 %v1008, -1.4531521
        %v1073 = vadd.f32 %v1009, -1.4531521
        %v1074 = vadd.f32 %v1010, -1.4531521
        %v1075 = vadd.f32 %v1011, -1.4531521
        %v1076 = vadd.f32 %v1012, -1.4531521
        %v1077 = vadd.f32 %v1013, -1.4531521
        %v1078 = vadd.f32 %v1014, -1.4531521
        %v1079 = vadd.f32 %v1015, -1.4531521
        %v1080 = vadd.f32 %v1016, -1.4531521
        %v1081 = vadd.f32 %v1017, -1.4531521
        %v1082 = vadd.f32 %v1018, -1.4531521
        %v1083 = vadd.f32 %v1019, -1.4531521
        %v1084 = vadd.f32 %v1020, -1.4531521
        %v1085 = vadd.f32 %v1021, -1.4531521
        %v1086 = vadd.f32 %v1022, -1.4531521
        %v1087 = vadd.f32 %v1023, -1.4531521
        %v1088 = vadd.f32 %v1024, -1.4531521
        %v1089 = vadd.f32 %v1025, -1.4531521
        %v1090 = vadd.f32 %v1026, -1.4531521
        %v1091 = vadd.f32 %v1027, -1.4531521
        %v1092 = vadd.f32 %v1028, -1.4531521
        %v1093 = vadd.f32 %v1029, -1.4531521
        %v1094 = vadd.f32 %v1030, -1.4531521
        %v1095 = vadd.f32 %v1031, -1.4531521
        %v1096 = vadd.f32 %v1032, -1.4531521
        %v1097 = vadd.f32 %v1033, -1.4531521
        %v1098 = vadd.f32 %v1034, -1.4531521
        %v1099 = vadd.f32 %v1035, -1.4531521
        %v1100 = vadd.f32 %v1036, -1.4531521
        %v1101 = vadd.f32 %v1037, -1.4531521
        %v1102 = vadd.f32 %v1038, -1.4531521
        %v1103 = vadd.f32 %v1039, -1.4531521
        %v1104 = vadd.f32 %v1040, -1.4531521
        %v1105 = vadd.f32 %v1041, -1.4531521
        %v1106 = vadd.f32 %v1042, -1.4531521
        %v1107 = vadd.f32 %v1043, -1.4531521
        %v1108 = vadd.f32 %v1044, -1.4531521
        %v1109 = vadd.f32 %v1045, -1.4531521
        %v1110 = vadd.f32 %v1046, -1.4531521
        %v1111 = vadd.f32 %v1047, -1.4531521
        %v1112 = vadd.f32 %v1048, -1.4531521
        %v1113 = vadd.f32 %v1049, -1.4531521
        %v1114 = vadd.f32 %v1050, -1.4531521
        %v1115 = vadd.f32 %v1051, -1.4531521
        %v1116 = vadd.f32 %v1052, -1.4531521
        %v1117 = vadd.f32 %v1053, -1.4531521
        %v1118 = vadd.f32 %v1054, -1.4531521
        %v1119 = vadd.f32 %v1055, -1.4531521
        %v1120 = vadd.f32 %v1056, -1.4531521
        %v1121 = vadd.f32 %v1057, -1.4531521
        %v1122 = vadd.f32 %v1058, -1.4531521
        %v1123 = vadd.f32 %v1059, -1.4531521
        %v1124 = vadd.f32 %v1060, -1.4531521
        %v1125 = vadd.f32 %v1061, -1.4531521
        %v1126 = vadd.f32 %v1062, -1.4531521
        %v1127 = vadd.f32 %v1063, -1.4531521
        %v1128 = vadd.f32 %v1064, -1.4531521
        %v1129 = vadd.f32 %v1065, -1.4531521
        %v1130 = vadd.f32 %v1066, -1.4531521
        %v1131 = vadd.f32 %v1067, -1.4531521
        %v1132 = vadd.f32 %v1068, -1.4531521
        %v1133 = vadd.f32 %v1069, -1.4531521
        %v1134 = vadd.f32 %v1070, -1.4531521
        %v1135 = vadd.f32 %v1071, -1.4531521
        %v1136 = vmul.f32 %v1072, %v944
        %v1137 = vmul.f32 %v1073, %v945
        %v1138 = vmul.f32 %v1074, %v946
        %v1139 = vmul.f32 %v1075, %v947
        %v1140 = vmul.f32 %v1076, %v948
        %v1141 = vmul.f32 %v1077, %v949
        %v1142 = vmul.f32 %v1078, %v950
        %v1143 = vmul.f32 %v1079, %v951
        %v1144 = vmul.f32 %v1080, %v952
        %v1145 = vmul.f32 %v1081, %v953
        %v1146 = vmul.f32 %v1082, %v954
        %v1147 = vmul.f32 %v1083, %v955
        %v1148 = vmul.f32 %v1084, %v956
        %v1149 = vmul.f32 %v1085, %v957
        %v1150 = vmul.f32 %v1086, %v958
        %v1151 = vmul.f32 %v1087, %v959
        %v1152 = vmul.f32 %v1088, %v960
        %v1153 = vmul.f32 %v1089, %v961
        %v1154 = vmul.f32 %v1090, %v962
        %v1155 = vmul.f32 %v1091, %v963
        %v1156 = vmul.f32 %v1092, %v964
        %v1157 = vmul.f32 %v1093, %v965
        %v1158 = vmul.f32 %v1094, %v966
        %v1159 = vmul.f32 %v1095, %v967
        %v1160 = vmul.f32 %v1096, %v968
        %v1161 = vmul.f32 %v1097, %v969
        %v1162 = vmul.f32 %v1098, %v970
        %v1163 = vmul.f32 %v1099, %v971
        %v1164 = vmul.f32 %v1100, %v972
        %v1165 = vmul.f32 %v1101, %v973
        %v1166 = vmul.f32 %v1102, %v974
        %v1167 = vmul.f32 %v1103, %v975
        %v1168 = vmul.f32 %v1104, %v976
        %v1169 = vmul.f32 %v1105, %v977
        %v1170 = vmul.f32 %v1106, %v978
        %v1171 = vmul.f32 %v1107, %v979
        %v1172 = vmul.f32 %v1108, %v980
        %v1173 = vmul.f32 %v1109, %v981
        %v1174 = vmul.f32 %v1110, %v982
        %v1175 = vmul.f32 %v1111, %v983
        %v1176 = vmul.f32 %v1112, %v984
        %v1177 = vmul.f32 %v1113, %v985
        %v1178 = vmul.f32 %v1114, %v986
        %v1179 = vmul.f32 %v1115, %v987
        %v1180 = vmul.f32 %v1116, %v988
        %v1181 = vmul.f32 %v1117, %v989
        %v1182 = vmul.f32 %v1118, %v990
        %v1183 = vmul.f32 %v1119, %v991
        %v1184 = vmul.f32 %v1120, %v992
        %v1185 = vmul.f32 %v1121, %v993
        %v1186 = vmul.f32 %v1122, %v994
        %v1187 = vmul.f32 %v1123, %v995
        %v1188 = vmul.f32 %v1124, %v996
        %v1189 = vmul.f32 %v1125, %v997
        %v1190 = vmul.f32 %v1126, %v998
        %v1191 = vmul.f32 %v1127, %v999
        %v1192 = vmul.f32 %v1128, %v1000
        %v1193 = vmul.f32 %v1129, %v1001
        %v1194 = vmul.f32 %v1130, %v1002
        %v1195 = vmul.f32 %v1131, %v1003
        %v1196 = vmul.f32 %v1132, %v1004
        %v1197 = vmul.f32 %v1133, %v1005
        %v1198 = vmul.f32 %v1134, %v1006
        %v1199 = vmul.f32 %v1135, %v1007
        %v1200 = vadd.f32 %v1136, 1.4214138
        %v1201 = vadd.f32 %v1137, 1.4214138
        %v1202 = vadd.f32 %v1138, 1.4214138
        %v1203 = vadd.f32 %v1139, 1.4214138
        %v1204 = vadd.f32 %v1140, 1.4214138
        %v1205 = vadd.f32 %v1141, 1.4214138
        %v1206 = vadd.f32 %v1142, 1.4214138
        %v1207 = vadd.f32 %v1143, 1.4214138
        %v1208 = vadd.f32 %v1144, 1.4214138
        %v1209 = vadd.f32 %v1145, 1.4214138
        %v1210 = vadd.f32 %v1146, 1.4214138
        %v1211 = vadd.f32 %v1147, 1.4214138
        %v1212 = vadd.f32 %v1148, 1.4214138
        %v1213 = vadd.f32 %v1149, 1.4214138
        %v1214 = vadd.f32 %v1150, 1.4214138
        %v1215 = vadd.f32 %v1151, 1.4214138
        %v1216 = vadd.f32 %v1152, 1.4214138
        %v1217 = vadd.f32 %v1153, 1.4214138
        %v1218 = vadd.f32 %v1154, 1.4214138
        %v1219 = vadd.f32 %v1155, 1.4214138
        %v1220 = vadd.f32 %v1156, 1.4214138
        %v1221 = vadd.f32 %v1157, 1.4214138
        %v1222 = vadd.f32 %v1158, 1.4214138
        %v1223 = vadd.f32 %v1159, 1.4214138
        %v1224 = vadd.f32 %v1160, 1.4214138
        %v1225 = vadd.f32 %v1161, 1.4214138
        %v1226 = vadd.f32 %v1162, 1.4214138
        %v1227 = vadd.f32 %v1163, 1.4214138
        %v1228 = vadd.f32 %v1164, 1.4214138
        %v1229 = vadd.f32 %v1165, 1.4214138
        %v1230 = vadd.f32 %v1166, 1.4214138
        %v1231 = vadd.f32 %v1167, 1.4214138
        %v1232 = vadd.f32 %v1168, 1.4214138
        %v1233 = vadd.f32 %v1169, 1.4214138
        %v1234 = vadd.f32 %v1170, 1.4214138
        %v1235 = vadd.f32 %v1171, 1.4214138
        %v1236 = vadd.f32 %v1172, 1.4214138
        %v1237 = vadd.f32 %v1173, 1.4214138
        %v1238 = vadd.f32 %v1174, 1.4214138
        %v1239 = vadd.f32 %v1175, 1.4214138
        %v1240 = vadd.f32 %v1176, 1.4214138
        %v1241 = vadd.f32 %v1177, 1.4214138
        %v1242 = vadd.f32 %v1178, 1.4214138
        %v1243 = vadd.f32 %v1179, 1.4214138
        %v1244 = vadd.f32 %v1180, 1.4214138
        %v1245 = vadd.f32 %v1181, 1.4214138
        %v1246 = vadd.f32 %v1182, 1.4214138
        %v1247 = vadd.f32 %v1183, 1.4214138
        %v1248 = vadd.f32 %v1184, 1.4214138
        %v1249 = vadd.f32 %v1185, 1.4214138
        %v1250 = vadd.f32 %v1186, 1.4214138
        %v1251 = vadd.f32 %v1187, 1.4214138
        %v1252 = vadd.f32 %v1188, 1.4214138
        %v1253 = vadd.f32 %v1189, 1.4214138
        %v1254 = vadd.f32 %v1190, 1.4214138
        %v1255 = vadd.f32 %v1191, 1.4214138
        %v1256 = vadd.f32 %v1192, 1.4214138
        %v1257 = vadd.f32 %v1193, 1.4214138
        %v1258 = vadd.f32 %v1194, 1.4214138
        %v1259 = vadd.f32 %v1195, 1.4214138
        %v1260 = vadd.f32 %v1196, 1.4214138
        %v1261 = vadd.f32 %v1197, 1.4214138
        %v1262 = vadd.f32 %v1198, 1.4214138
        %v1263 = vadd.f32 %v1199, 1.4214138
        %v1264 = vmul.f32 %v1200, %v944
        %v1265 = vmul.f32 %v1201, %v945
        %v1266 = vmul.f32 %v1202, %v946
        %v1267 = vmul.f32 %v1203, %v947
        %v1268 = vmul.f32 %v1204, %v948
        %v1269 = vmul.f32 %v1205, %v949
        %v1270 = vmul.f32 %v1206, %v950
        %v1271 = vmul.f32 %v1207, %v951
        %v1272 = vmul.f32 %v1208, %v952
        %v1273 = vmul.f32 %v1209, %v953
        %v1274 = vmul.f32 %v1210, %v954
        %v1275 = vmul.f32 %v1211, %v955
        %v1276 = vmul.f32 %v1212, %v956
        %v1277 = vmul.f32 %v1213, %v957
        %v1278 = vmul.f32 %v1214, %v958
        %v1279 = vmul.f32 %v1215, %v959
        %v1280 = vmul.f32 %v1216, %v960
        %v1281 = vmul.f32 %v1217, %v961
        %v1282 = vmul.f32 %v1218, %v962
        %v1283 = vmul.f32 %v1219, %v963
        %v1284 = vmul.f32 %v1220, %v964
        %v1285 = vmul.f32 %v1221, %v965
        %v1286 = vmul.f32 %v1222, %v966
        %v1287 = vmul.f32 %v1223, %v967
        %v1288 = vmul.f32 %v1224, %v968
        %v1289 = vmul.f32 %v1225, %v969
        %v1290 = vmul.f32 %v1226, %v970
        %v1291 = vmul.f32 %v1227, %v971
        %v1292 = vmul.f32 %v1228, %v972
        %v1293 = vmul.f32 %v1229, %v973
        %v1294 = vmul.f32 %v1230, %v974
        %v1295 = vmul.f32 %v1231, %v975
        %v1296 = vmul.f32 %v1232, %v976
        %v1297 = vmul.f32 %v1233, %v977
        %v1298 = vmul.f32 %v1234, %v978
        %v1299 = vmul.f32 %v1235, %v979
        %v1300 = vmul.f32 %v1236, %v980
        %v1301 = vmul.f32 %v1237, %v981
        %v1302 = vmul.f32 %v1238, %v982
        %v1303 = vmul.f32 %v1239, %v983
        %v1304 = vmul.f32 %v1240, %v984
        %v1305 = vmul.f32 %v1241, %v985
        %v1306 = vmul.f32 %v1242, %v986
        %v1307 = vmul.f32 %v1243, %v987
        %v1308 = vmul.f32 %v1244, %v988
        %v1309 = vmul.f32 %v1245, %v989
        %v1310 = vmul.f32 %v1246, %v990
        %v1311 = vmul.f32 %v1247, %v991
        %v1312 = vmul.f32 %v1248, %v992
        %v1313 = vmul.f32 %v1249, %v993
        %v1314 = vmul.f32 %v1250, %v994
        %v1315 = vmul.f32 %v1251, %v995
        %v1316 = vmul.f32 %v1252, %v996
        %v1317 = vmul.f32 %v1253, %v997
        %v1318 = vmul.f32 %v1254, %v998
        %v1319 = vmul.f32 %v1255, %v999
        %v1320 = vmul.f32 %v1256, %v1000
        %v1321 = vmul.f32 %v1257, %v1001
        %v1322 = vmul.f32 %v1258, %v1002
        %v1323 = vmul.f32 %v1259, %v1003
        %v1324 = vmul.f32 %v1260, %v1004
        %v1325 = vmul.f32 %v1261, %v1005
        %v1326 = vmul.f32 %v1262, %v1006
        %v1327 = vmul.f32 %v1263, %v1007
        %v1328 = vadd.f32 %v1264, -0.28449672
        %v1329 = vadd.f32 %v1265, -0.28449672
        %v1330 = vadd.f32 %v1266, -0.28449672
        %v1331 = vadd.f32 %v1267, -0.28449672
        %v1332 = vadd.f32 %v1268, -0.28449672
        %v1333 = vadd.f32 %v1269, -0.28449672
        %v1334 = vadd.f32 %v1270, -0.28449672
        %v1335 = vadd.f32 %v1271, -0.28449672
        %v1336 = vadd.f32 %v1272, -0.28449672
        %v1337 = vadd.f32 %v1273, -0.28449672
        %v1338 = vadd.f32 %v1274, -0.28449672
        %v1339 = vadd.f32 %v1275, -0.28449672
        %v1340 = vadd.f32 %v1276, -0.28449672
        %v1341 = vadd.f32 %v1277, -0.28449672
        %v1342 = vadd.f32 %v1278, -0.28449672
        %v1343 = vadd.f32 %v1279, -0.28449672
        %v1344 = vadd.f32 %v1280, -0.28449672
        %v1345 = vadd.f32 %v1281, -0.28449672
        %v1346 = vadd.f32 %v1282, -0.28449672
        %v1347 = vadd.f32 %v1283, -0.28449672
        %v1348 = vadd.f32 %v1284, -0.28449672
        %v1349 = vadd.f32 %v1285, -0.28449672
        %v1350 = vadd.f32 %v1286, -0.28449672
        %v1351 = vadd.f32 %v1287, -0.28449672
        %v1352 = vadd.f32 %v1288, -0.28449672
        %v1353 = vadd.f32 %v1289, -0.28449672
        %v1354 = vadd.f32 %v1290, -0.28449672
        %v1355 = vadd.f32 %v1291, -0.28449672
        %v1356 = vadd.f32 %v1292, -0.28449672
        %v1357 = vadd.f32 %v1293, -0.28449672
        %v1358 = vadd.f32 %v1294, -0.28449672
        %v1359 = vadd.f32 %v1295, -0.28449672
        %v1360 = vadd.f32 %v1296, -0.28449672
        %v1361 = vadd.f32 %v1297, -0.28449672
        %v1362 = vadd.f32 %v1298, -0.28449672
        %v1363 = vadd.f32 %v1299, -0.28449672
        %v1364 = vadd.f32 %v1300, -0.28449672
        %v1365 = vadd.f32 %v1301, -0.28449672
        %v1366 = vadd.f32 %v1302, -0.28449672
        %v1367 = vadd.f32 %v1303, -0.28449672
        %v1368 = vadd.f32 %v1304, -0.28449672
        %v1369 = vadd.f32 %v1305, -0.28449672
        %v1370 = vadd.f32 %v1306, -0.28449672
        %v1371 = vadd.f32 %v1307, -0.28449672
        %v1372 = vadd.f32 %v1308, -0.28449672
        %v1373 = vadd.f32 %v1309, -0.28449672
        %v1374 = vadd.f32 %v1310, -0.28449672
        %v1375 = vadd.f32 %v1311, -0.28449672
        %v1376 = vadd.f32 %v1312, -0.28449672
        %v1377 = vadd.f32 %v1313, -0.28449672
        %v1378 = vadd.f32 %v1314, -0.28449672
        %v1379 = vadd.f32 %v1315, -0.28449672
        %v1380 = vadd.f32 %v1316, -0.28449672
        %v1381 = vadd.f32 %v1317, -0.28449672
        %v1382 = vadd.f32 %v1318, -0.28449672
        %v1383 = vadd.f32 %v1319, -0.28449672
        %v1384 = vadd.f32 %v1320, -0.28449672
        %v1385 = vadd.f32 %v1321, -0.28449672
        %v1386 = vadd.f32 %v1322, -0.28449672
        %v1387 = vadd.f32 %v1323, -0.28449672
        %v1388 = vadd.f32 %v1324, -0.28449672
        %v1389 = vadd.f32 %v1325, -0.28449672
        %v1390 = vadd.f32 %v1326, -0.28449672
        %v1391 = vadd.f32 %v1327, -0.28449672
        %v1392 = vmul.f32 %v1328, %v944
        %v1393 = vmul.f32 %v1329, %v945
        %v1394 = vmul.f32 %v1330, %v946
        %v1395 = vmul.f32 %v1331, %v947
        %v1396 = vmul.f32 %v1332, %v948
        %v1397 = vmul.f32 %v1333, %v949
        %v1398 = vmul.f32 %v1334, %v950
        %v1399 = vmul.f32 %v1335, %v951
        %v1400 = vmul.f32 %v1336, %v952
        %v1401 = vmul.f32 %v1337, %v953
        %v1402 = vmul.f32 %v1338, %v954
        %v1403 = vmul.f32 %v1339, %v955
        %v1404 = vmul.f32 %v1340, %v956
        %v1405 = vmul.f32 %v1341, %v957
        %v1406 = vmul.f32 %v1342, %v958
        %v1407 = vmul.f32 %v1343, %v959
        %v1408 = vmul.f32 %v1344, %v960
        %v1409 = vmul.f32 %v1345, %v961
        %v1410 = vmul.f32 %v1346, %v962
        %v1411 = vmul.f32 %v1347, %v963
        %v1412 = vmul.f32 %v1348, %v964
        %v1413 = vmul.f32 %v1349, %v965
        %v1414 = vmul.f32 %v1350, %v966
        %v1415 = vmul.f32 %v1351, %v967
        %v1416 = vmul.f32 %v1352, %v968
        %v1417 = vmul.f32 %v1353, %v969
        %v1418 = vmul.f32 %v1354, %v970
        %v1419 = vmul.f32 %v1355, %v971
        %v1420 = vmul.f32 %v1356, %v972
        %v1421 = vmul.f32 %v1357, %v973
        %v1422 = vmul.f32 %v1358, %v974
        %v1423 = vmul.f32 %v1359, %v975
        %v1424 = vmul.f32 %v1360, %v976
        %v1425 = vmul.f32 %v1361, %v977
        %v1426 = vmul.f32 %v1362, %v978
        %v1427 = vmul.f32 %v1363, %v979
        %v1428 = vmul.f32 %v1364, %v980
        %v1429 = vmul.f32 %v1365, %v981
        %v1430 = vmul.f32 %v1366, %v982
        %v1431 = vmul.f32 %v1367, %v983
        %v1432 = vmul.f32 %v1368, %v984
        %v1433 = vmul.f32 %v1369, %v985
        %v1434 = vmul.f32 %v1370, %v986
        %v1435 = vmul.f32 %v1371, %v987
        %v1436 = vmul.f32 %v1372, %v988
        %v1437 = vmul.f32 %v1373, %v989
        %v1438 = vmul.f32 %v1374, %v990
        %v1439 = vmul.f32 %v1375, %v991
        %v1440 = vmul.f32 %v1376, %v992
        %v1441 = vmul.f32 %v1377, %v993
        %v1442 = vmul.f32 %v1378, %v994
        %v1443 = vmul.f32 %v1379, %v995
        %v1444 = vmul.f32 %v1380, %v996
        %v1445 = vmul.f32 %v1381, %v997
        %v1446 = vmul.f32 %v1382, %v998
        %v1447 = vmul.f32 %v1383, %v999
        %v1448 = vmul.f32 %v1384, %v1000
        %v1449 = vmul.f32 %v1385, %v1001
        %v1450 = vmul.f32 %v1386, %v1002
        %v1451 = vmul.f32 %v1387, %v1003
        %v1452 = vmul.f32 %v1388, %v1004
        %v1453 = vmul.f32 %v1389, %v1005
        %v1454 = vmul.f32 %v1390, %v1006
        %v1455 = vmul.f32 %v1391, %v1007
        %v1456 = vadd.f32 %v1392, 0.2548296
        %v1457 = vadd.f32 %v1393, 0.2548296
        %v1458 = vadd.f32 %v1394, 0.2548296
        %v1459 = vadd.f32 %v1395, 0.2548296
        %v1460 = vadd.f32 %v1396, 0.2548296
        %v1461 = vadd.f32 %v1397, 0.2548296
        %v1462 = vadd.f32 %v1398, 0.2548296
        %v1463 = vadd.f32 %v1399, 0.2548296
        %v1464 = vadd.f32 %v1400, 0.2548296
        %v1465 = vadd.f32 %v1401, 0.2548296
        %v1466 = vadd.f32 %v1402, 0.2548296
        %v1467 = vadd.f32 %v1403, 0.2548296
        %v1468 = vadd.f32 %v1404, 0.2548296
        %v1469 = vadd.f32 %v1405, 0.2548296
        %v1470 = vadd.f32 %v1406, 0.2548296
        %v1471 = vadd.f32 %v1407, 0.2548296
        %v1472 = vadd.f32 %v1408, 0.2548296
        %v1473 = vadd.f32 %v1409, 0.2548296
        %v1474 = vadd.f32 %v1410, 0.2548296
        %v1475 = vadd.f32 %v1411, 0.2548296
        %v1476 = vadd.f32 %v1412, 0.2548296
        %v1477 = vadd.f32 %v1413, 0.2548296
        %v1478 = vadd.f32 %v1414, 0.2548296
        %v1479 = vadd.f32 %v1415, 0.2548296
        %v1480 = vadd.f32 %v1416, 0.2548296
        %v1481 = vadd.f32 %v1417, 0.2548296
        %v1482 = vadd.f32 %v1418, 0.2548296
        %v1483 = vadd.f32 %v1419, 0.2548296
        %v1484 = vadd.f32 %v1420, 0.2548296
        %v1485 = vadd.f32 %v1421, 0.2548296
        %v1486 = vadd.f32 %v1422, 0.2548296
        %v1487 = vadd.f32 %v1423, 0.2548296
        %v1488 = vadd.f32 %v1424, 0.2548296
        %v1489 = vadd.f32 %v1425, 0.2548296
        %v1490 = vadd.f32 %v1426, 0.2548296
        %v1491 = vadd.f32 %v1427, 0.2548296
        %v1492 = vadd.f32 %v1428, 0.2548296
        %v1493 = vadd.f32 %v1429, 0.2548296
        %v1494 = vadd.f32 %v1430, 0.2548296
        %v1495 = vadd.f32 %v1431, 0.2548296
        %v1496 = vadd.f32 %v1432, 0.2548296
        %v1497 = vadd.f32 %v1433, 0.2548296
        %v1498 = vadd.f32 %v1434, 0.2548296
        %v1499 = vadd.f32 %v1435, 0.2548296
        %v1500 = vadd.f32 %v1436, 0.2548296
        %v1501 = vadd.f32 %v1437, 0.2548296
        %v1502 = vadd.f32 %v1438, 0.2548296
        %v1503 = vadd.f32 %v1439, 0.2548296
        %v1504 = vadd.f32 %v1440, 0.2548296
        %v1505 = vadd.f32 %v1441, 0.2548296
        %v1506 = vadd.f32 %v1442, 0.2548296
        %v1507 = vadd.f32 %v1443, 0.2548296
        %v1508 = vadd.f32 %v1444, 0.2548296
        %v1509 = vadd.f32 %v1445, 0.2548296
        %v1510 = vadd.f32 %v1446, 0.2548296
        %v1511 = vadd.f32 %v1447, 0.2548296
        %v1512 = vadd.f32 %v1448, 0.2548296
        %v1513 = vadd.f32 %v1449, 0.2548296
        %v1514 = vadd.f32 %v1450, 0.2548296
        %v1515 = vadd.f32 %v1451, 0.2548296
        %v1516 = vadd.f32 %v1452, 0.2548296
        %v1517 = vadd.f32 %v1453, 0.2548296
        %v1518 = vadd.f32 %v1454, 0.2548296
        %v1519 = vadd.f32 %v1455, 0.2548296
        %v1520 = vmul.f32 %v1456, %v944
        %v1521 = vmul.f32 %v1457, %v945
        %v1522 = vmul.f32 %v1458, %v946
        %v1523 = vmul.f32 %v1459, %v947
        %v1524 = vmul.f32 %v1460, %v948
        %v1525 = vmul.f32 %v1461, %v949
        %v1526 = vmul.f32 %v1462, %v950
        %v1527 = vmul.f32 %v1463, %v951
        %v1528 = vmul.f32 %v1464, %v952
        %v1529 = vmul.f32 %v1465, %v953
        %v1530 = vmul.f32 %v1466, %v954
        %v1531 = vmul.f32 %v1467, %v955
        %v1532 = vmul.f32 %v1468, %v956
        %v1533 = vmul.f32 %v1469, %v957
        %v1534 = vmul.f32 %v1470, %v958
        %v1535 = vmul.f32 %v1471, %v959
        %v1536 = vmul.f32 %v1472, %v960
        %v1537 = vmul.f32 %v1473, %v961
        %v1538 = vmul.f32 %v1474, %v962
        %v1539 = vmul.f32 %v1475, %v963
        %v1540 = vmul.f32 %v1476, %v964
        %v1541 = vmul.f32 %v1477, %v965
        %v1542 = vmul.f32 %v1478, %v966
        %v1543 = vmul.f32 %v1479, %v967
        %v1544 = vmul.f32 %v1480, %v968
        %v1545 = vmul.f32 %v1481, %v969
        %v1546 = vmul.f32 %v1482, %v970
        %v1547 = vmul.f32 %v1483, %v971
        %v1548 = vmul.f32 %v1484, %v972
        %v1549 = vmul.f32 %v1485, %v973
        %v1550 = vmul.f32 %v1486, %v974
        %v1551 = vmul.f32 %v1487, %v975
        %v1552 = vmul.f32 %v1488, %v976
        %v1553 = vmul.f32 %v1489, %v977
        %v1554 = vmul.f32 %v1490, %v978
        %v1555 = vmul.f32 %v1491, %v979
        %v1556 = vmul.f32 %v1492, %v980
        %v1557 = vmul.f32 %v1493, %v981
        %v1558 = vmul.f32 %v1494, %v982
        %v1559 = vmul.f32 %v1495, %v983
        %v1560 = vmul.f32 %v1496, %v984
        %v1561 = vmul.f32 %v1497, %v985
        %v1562 = vmul.f32 %v1498, %v986
        %v1563 = vmul.f32 %v1499, %v987
        %v1564 = vmul.f32 %v1500, %v988
        %v1565 = vmul.f32 %v1501, %v989
        %v1566 = vmul.f32 %v1502, %v990
        %v1567 = vmul.f32 %v1503, %v991
        %v1568 = vmul.f32 %v1504, %v992
        %v1569 = vmul.f32 %v1505, %v993
        %v1570 = vmul.f32 %v1506, %v994
        %v1571 = vmul.f32 %v1507, %v995
        %v1572 = vmul.f32 %v1508, %v996
        %v1573 = vmul.f32 %v1509, %v997
        %v1574 = vmul.f32 %v1510, %v998
        %v1575 = vmul.f32 %v1511, %v999
        %v1576 = vmul.f32 %v1512, %v1000
        %v1577 = vmul.f32 %v1513, %v1001
        %v1578 = vmul.f32 %v1514, %v1002
        %v1579 = vmul.f32 %v1515, %v1003
        %v1580 = vmul.f32 %v1516, %v1004
        %v1581 = vmul.f32 %v1517, %v1005
        %v1582 = vmul.f32 %v1518, %v1006
        %v1583 = vmul.f32 %v1519, %v1007
        %v1584 = vsub.f32 0.0, %v752
        %v1585 = vsub.f32 0.0, %v753
        %v1586 = vsub.f32 0.0, %v754
        %v1587 = vsub.f32 0.0, %v755
        %v1588 = vsub.f32 0.0, %v756
        %v1589 = vsub.f32 0.0, %v757
        %v1590 = vsub.f32 0.0, %v758
        %v1591 = vsub.f32 0.0, %v759
        %v1592 = vsub.f32 0.0, %v760
        %v1593 = vsub.f32 0.0, %v761
        %v1594 = vsub.f32 0.0, %v762
        %v1595 = vsub.f32 0.0, %v763
        %v1596 = vsub.f32 0.0, %v764
        %v1597 = vsub.f32 0.0, %v765
        %v1598 = vsub.f32 0.0, %v766
        %v1599 = vsub.f32 0.0, %v767
        %v1600 = vsub.f32 0.0, %v768
        %v1601 = vsub.f32 0.0, %v769
        %v1602 = vsub.f32 0.0, %v770
        %v1603 = vsub.f32 0.0, %v771
        %v1604 = vsub.f32 0.0, %v772
        %v1605 = vsub.f32 0.0, %v773
        %v1606 = vsub.f32 0.0, %v774
        %v1607 = vsub.f32 0.0, %v775
        %v1608 = vsub.f32 0.0, %v776
        %v1609 = vsub.f32 0.0, %v777
        %v1610 = vsub.f32 0.0, %v778
        %v1611 = vsub.f32 0.0, %v779
        %v1612 = vsub.f32 0.0, %v780
        %v1613 = vsub.f32 0.0, %v781
        %v1614 = vsub.f32 0.0, %v782
        %v1615 = vsub.f32 0.0, %v783
        %v1616 = vsub.f32 0.0, %v784
        %v1617 = vsub.f32 0.0, %v785
        %v1618 = vsub.f32 0.0, %v786
        %v1619 = vsub.f32 0.0, %v787
        %v1620 = vsub.f32 0.0, %v788
        %v1621 = vsub.f32 0.0, %v789
        %v1622 = vsub.f32 0.0, %v790
        %v1623 = vsub.f32 0.0, %v791
        %v1624 = vsub.f32 0.0, %v792
        %v1625 = vsub.f32 0.0, %v793
        %v1626 = vsub.f32 0.0, %v794
        %v1627 = vsub.f32 0.0, %v795
        %v1628 = vsub.f32 0.0, %v796
        %v1629 = vsub.f32 0.0, %v797
        %v1630 = vsub.f32 0.0, %v798
        %v1631 = vsub.f32 0.0, %v799
        %v1632 = vsub.f32 0.0, %v800
        %v1633 = vsub.f32 0.0, %v801
        %v1634 = vsub.f32 0.0, %v802
        %v1635 = vsub.f32 0.0, %v803
        %v1636 = vsub.f32 0.0, %v804
        %v1637 = vsub.f32 0.0, %v805
        %v1638 = vsub.f32 0.0, %v806
        %v1639 = vsub.f32 0.0, %v807
        %v1640 = vsub.f32 0.0, %v808
        %v1641 = vsub.f32 0.0, %v809
        %v1642 = vsub.f32 0.0, %v810
        %v1643 = vsub.f32 0.0, %v811
        %v1644 = vsub.f32 0.0, %v812
        %v1645 = vsub.f32 0.0, %v813
        %v1646 = vsub.f32 0.0, %v814
        %v1647 = vsub.f32 0.0, %v815
        %v1648 = vmul.f32 %v1584, %v752
        %v1649 = vmul.f32 %v1585, %v753
        %v1650 = vmul.f32 %v1586, %v754
        %v1651 = vmul.f32 %v1587, %v755
        %v1652 = vmul.f32 %v1588, %v756
        %v1653 = vmul.f32 %v1589, %v757
        %v1654 = vmul.f32 %v1590, %v758
        %v1655 = vmul.f32 %v1591, %v759
        %v1656 = vmul.f32 %v1592, %v760
        %v1657 = vmul.f32 %v1593, %v761
        %v1658 = vmul.f32 %v1594, %v762
        %v1659 = vmul.f32 %v1595, %v763
        %v1660 = vmul.f32 %v1596, %v764
        %v1661 = vmul.f32 %v1597, %v765
        %v1662 = vmul.f32 %v1598, %v766
        %v1663 = vmul.f32 %v1599, %v767
        %v1664 = vmul.f32 %v1600, %v768
        %v1665 = vmul.f32 %v1601, %v769
        %v1666 = vmul.f32 %v1602, %v770
        %v1667 = vmul.f32 %v1603, %v771
        %v1668 = vmul.f32 %v1604, %v772
        %v1669 = vmul.f32 %v1605, %v773
        %v1670 = vmul.f32 %v1606, %v774
        %v1671 = vmul.f32 %v1607, %v775
        %v1672 = vmul.f32 %v1608, %v776
        %v1673 = vmul.f32 %v1609, %v777
        %v1674 = vmul.f32 %v1610, %v778
        %v1675 = vmul.f32 %v1611, %v779
        %v1676 = vmul.f32 %v1612, %v780
        %v1677 = vmul.f32 %v1613, %v781
        %v1678 = vmul.f32 %v1614, %v782
        %v1679 = vmul.f32 %v1615, %v783
        %v1680 = vmul.f32 %v1616, %v784
        %v1681 = vmul.f32 %v1617, %v785
        %v1682 = vmul.f32 %v1618, %v786
        %v1683 = vmul.f32 %v1619, %v787
        %v1684 = vmul.f32 %v1620, %v788
        %v1685 = vmul.f32 %v1621, %v789
        %v1686 = vmul.f32 %v1622, %v790
        %v1687 = vmul.f32 %v1623, %v791
        %v1688 = vmul.f32 %v1624, %v792
        %v1689 = vmul.f32 %v1625, %v793
        %v1690 = vmul.f32 %v1626, %v794
        %v1691 = vmul.f32 %v1627, %v795
        %v1692 = vmul.f32 %v1628, %v796
        %v1693 = vmul.f32 %v1629, %v797
        %v1694 = vmul.f32 %v1630, %v798
        %v1695 = vmul.f32 %v1631, %v799
        %v1696 = vmul.f32 %v1632, %v800
        %v1697 = vmul.f32 %v1633, %v801
        %v1698 = vmul.f32 %v1634, %v802
        %v1699 = vmul.f32 %v1635, %v803
        %v1700 = vmul.f32 %v1636, %v804
        %v1701 = vmul.f32 %v1637, %v805
        %v1702 = vmul.f32 %v1638, %v806
        %v1703 = vmul.f32 %v1639, %v807
        %v1704 = vmul.f32 %v1640, %v808
        %v1705 = vmul.f32 %v1641, %v809
        %v1706 = vmul.f32 %v1642, %v810
        %v1707 = vmul.f32 %v1643, %v811
        %v1708 = vmul.f32 %v1644, %v812
        %v1709 = vmul.f32 %v1645, %v813
        %v1710 = vmul.f32 %v1646, %v814
        %v1711 = vmul.f32 %v1647, %v815
        %v1712 = vmul.f32 %v1648, 1.442695
        %v1713 = vpow.pop %v1712
        %v1714 = vmul.f32 %v1649, 1.442695
        %v1715 = vpow.pop %v1714
        %v1716 = vmul.f32 %v1650, 1.442695
        %v1717 = vpow.pop %v1716
        %v1718 = vmul.f32 %v1651, 1.442695
        %v1719 = vpow.pop %v1718
        %v1720 = vmul.f32 %v1652, 1.442695
        %v1721 = vpow.pop %v1720
        %v1722 = vmul.f32 %v1653, 1.442695
        %v1723 = vpow.pop %v1722
        %v1724 = vmul.f32 %v1654, 1.442695
        %v1725 = vpow.pop %v1724
        %v1726 = vmul.f32 %v1655, 1.442695
        %v1727 = vpow.pop %v1726
        %v1728 = vmul.f32 %v1656, 1.442695
        %v1729 = vpow.pop %v1728
        %v1730 = vmul.f32 %v1657, 1.442695
        %v1731 = vpow.pop %v1730
        %v1732 = vmul.f32 %v1658, 1.442695
        %v1733 = vpow.pop %v1732
        %v1734 = vmul.f32 %v1659, 1.442695
        %v1735 = vpow.pop %v1734
        %v1736 = vmul.f32 %v1660, 1.442695
        %v1737 = vpow.pop %v1736
        %v1738 = vmul.f32 %v1661, 1.442695
        %v1739 = vpow.pop %v1738
        %v1740 = vmul.f32 %v1662, 1.442695
        %v1741 = vpow.pop %v1740
        %v1742 = vmul.f32 %v1663, 1.442695
        %v1743 = vpow.pop %v1742
        %v1744 = vmul.f32 %v1664, 1.442695
        %v1745 = vpow.pop %v1744
        %v1746 = vmul.f32 %v1665, 1.442695
        %v1747 = vpow.pop %v1746
        %v1748 = vmul.f32 %v1666, 1.442695
        %v1749 = vpow.pop %v1748
        %v1750 = vmul.f32 %v1667, 1.442695
        %v1751 = vpow.pop %v1750
        %v1752 = vmul.f32 %v1668, 1.442695
        %v1753 = vpow.pop %v1752
        %v1754 = vmul.f32 %v1669, 1.442695
        %v1755 = vpow.pop %v1754
        %v1756 = vmul.f32 %v1670, 1.442695
        %v1757 = vpow.pop %v1756
        %v1758 = vmul.f32 %v1671, 1.442695
        %v1759 = vpow.pop %v1758
        %v1760 = vmul.f32 %v1672, 1.442695
        %v1761 = vpow.pop %v1760
        %v1762 = vmul.f32 %v1673, 1.442695
        %v1763 = vpow.pop %v1762
        %v1764 = vmul.f32 %v1674, 1.442695
        %v1765 = vpow.pop %v1764
        %v1766 = vmul.f32 %v1675, 1.442695
        %v1767 = vpow.pop %v1766
        %v1768 = vmul.f32 %v1676, 1.442695
        %v1769 = vpow.pop %v1768
        %v1770 = vmul.f32 %v1677, 1.442695
        %v1771 = vpow.pop %v1770
        %v1772 = vmul.f32 %v1678, 1.442695
        %v1773 = vpow.pop %v1772
        %v1774 = vmul.f32 %v1679, 1.442695
        %v1775 = vpow.pop %v1774
        %v1776 = vmul.f32 %v1680, 1.442695
        %v1777 = vpow.pop %v1776
        %v1778 = vmul.f32 %v1681, 1.442695
        %v1779 = vpow.pop %v1778
        %v1780 = vmul.f32 %v1682, 1.442695
        %v1781 = vpow.pop %v1780
        %v1782 = vmul.f32 %v1683, 1.442695
        %v1783 = vpow.pop %v1782
        %v1784 = vmul.f32 %v1684, 1.442695
        %v1785 = vpow.pop %v1784
        %v1786 = vmul.f32 %v1685, 1.442695
        %v1787 = vpow.pop %v1786
        %v1788 = vmul.f32 %v1686, 1.442695
        %v1789 = vpow.pop %v1788
        %v1790 = vmul.f32 %v1687, 1.442695
        %v1791 = vpow.pop %v1790
        %v1792 = vmul.f32 %v1688, 1.442695
        %v1793 = vpow.pop %v1792
        %v1794 = vmul.f32 %v1689, 1.442695
        %v1795 = vpow.pop %v1794
        %v1796 = vmul.f32 %v1690, 1.442695
        %v1797 = vpow.pop %v1796
        %v1798 = vmul.f32 %v1691, 1.442695
        %v1799 = vpow.pop %v1798
        %v1800 = vmul.f32 %v1692, 1.442695
        %v1801 = vpow.pop %v1800
        %v1802 = vmul.f32 %v1693, 1.442695
        %v1803 = vpow.pop %v1802
        %v1804 = vmul.f32 %v1694, 1.442695
        %v1805 = vpow.pop %v1804
        %v1806 = vmul.f32 %v1695, 1.442695
        %v1807 = vpow.pop %v1806
        %v1808 = vmul.f32 %v1696, 1.442695
        %v1809 = vpow.pop %v1808
        %v1810 = vmul.f32 %v1697, 1.442695
        %v1811 = vpow.pop %v1810
        %v1812 = vmul.f32 %v1698, 1.442695
        %v1813 = vpow.pop %v1812
        %v1814 = vmul.f32 %v1699, 1.442695
        %v1815 = vpow.pop %v1814
        %v1816 = vmul.f32 %v1700, 1.442695
        %v1817 = vpow.pop %v1816
        %v1818 = vmul.f32 %v1701, 1.442695
        %v1819 = vpow.pop %v1818
        %v1820 = vmul.f32 %v1702, 1.442695
        %v1821 = vpow.pop %v1820
        %v1822 = vmul.f32 %v1703, 1.442695
        %v1823 = vpow.pop %v1822
        %v1824 = vmul.f32 %v1704, 1.442695
        %v1825 = vpow.pop %v1824
        %v1826 = vmul.f32 %v1705, 1.442695
        %v1827 = vpow.pop %v1826
        %v1828 = vmul.f32 %v1706, 1.442695
        %v1829 = vpow.pop %v1828
        %v1830 = vmul.f32 %v1707, 1.442695
        %v1831 = vpow.pop %v1830
        %v1832 = vmul.f32 %v1708, 1.442695
        %v1833 = vpow.pop %v1832
        %v1834 = vmul.f32 %v1709, 1.442695
        %v1835 = vpow.pop %v1834
        %v1836 = vmul.f32 %v1710, 1.442695
        %v1837 = vpow.pop %v1836
        %v1838 = vmul.f32 %v1711, 1.442695
        %v1839 = vpow.pop %v1838
        %v1840 = vmul.f32 %v1520, %v1713
        %v1841 = vmul.f32 %v1521, %v1715
        %v1842 = vmul.f32 %v1522, %v1717
        %v1843 = vmul.f32 %v1523, %v1719
        %v1844 = vmul.f32 %v1524, %v1721
        %v1845 = vmul.f32 %v1525, %v1723
        %v1846 = vmul.f32 %v1526, %v1725
        %v1847 = vmul.f32 %v1527, %v1727
        %v1848 = vmul.f32 %v1528, %v1729
        %v1849 = vmul.f32 %v1529, %v1731
        %v1850 = vmul.f32 %v1530, %v1733
        %v1851 = vmul.f32 %v1531, %v1735
        %v1852 = vmul.f32 %v1532, %v1737
        %v1853 = vmul.f32 %v1533, %v1739
        %v1854 = vmul.f32 %v1534, %v1741
        %v1855 = vmul.f32 %v1535, %v1743
        %v1856 = vmul.f32 %v1536, %v1745
        %v1857 = vmul.f32 %v1537, %v1747
        %v1858 = vmul.f32 %v1538, %v1749
        %v1859 = vmul.f32 %v1539, %v1751
        %v1860 = vmul.f32 %v1540, %v1753
        %v1861 = vmul.f32 %v1541, %v1755
        %v1862 = vmul.f32 %v1542, %v1757
        %v1863 = vmul.f32 %v1543, %v1759
        %v1864 = vmul.f32 %v1544, %v1761
        %v1865 = vmul.f32 %v1545, %v1763
        %v1866 = vmul.f32 %v1546, %v1765
        %v1867 = vmul.f32 %v1547, %v1767
        %v1868 = vmul.f32 %v1548, %v1769
        %v1869 = vmul.f32 %v1549, %v1771
        %v1870 = vmul.f32 %v1550, %v1773
        %v1871 = vmul.f32 %v1551, %v1775
        %v1872 = vmul.f32 %v1552, %v1777
        %v1873 = vmul.f32 %v1553, %v1779
        %v1874 = vmul.f32 %v1554, %v1781
        %v1875 = vmul.f32 %v1555, %v1783
        %v1876 = vmul.f32 %v1556, %v1785
        %v1877 = vmul.f32 %v1557, %v1787
        %v1878 = vmul.f32 %v1558, %v1789
        %v1879 = vmul.f32 %v1559, %v1791
        %v1880 = vmul.f32 %v1560, %v1793
        %v1881 = vmul.f32 %v1561, %v1795
        %v1882 = vmul.f32 %v1562, %v1797
        %v1883 = vmul.f32 %v1563, %v1799
        %v1884 = vmul.f32 %v1564, %v1801
        %v1885 = vmul.f32 %v1565, %v1803
        %v1886 = vmul.f32 %v1566, %v1805
        %v1887 = vmul.f32 %v1567, %v1807
        %v1888 = vmul.f32 %v1568, %v1809
        %v1889 = vmul.f32 %v1569, %v1811
        %v1890 = vmul.f32 %v1570, %v1813
        %v1891 = vmul.f32 %v1571, %v1815
        %v1892 = vmul.f32 %v1572, %v1817
        %v1893 = vmul.f32 %v1573, %v1819
        %v1894 = vmul.f32 %v1574, %v1821
        %v1895 = vmul.f32 %v1575, %v1823
        %v1896 = vmul.f32 %v1576, %v1825
        %v1897 = vmul.f32 %v1577, %v1827
        %v1898 = vmul.f32 %v1578, %v1829
        %v1899 = vmul.f32 %v1579, %v1831
        %v1900 = vmul.f32 %v1580, %v1833
        %v1901 = vmul.f32 %v1581, %v1835
        %v1902 = vmul.f32 %v1582, %v1837
        %v1903 = vmul.f32 %v1583, %v1839
        %v1904 = vsub.f32 1.0, %v1840
        %v1905 = vsub.f32 1.0, %v1841
        %v1906 = vsub.f32 1.0, %v1842
        %v1907 = vsub.f32 1.0, %v1843
        %v1908 = vsub.f32 1.0, %v1844
        %v1909 = vsub.f32 1.0, %v1845
        %v1910 = vsub.f32 1.0, %v1846
        %v1911 = vsub.f32 1.0, %v1847
        %v1912 = vsub.f32 1.0, %v1848
        %v1913 = vsub.f32 1.0, %v1849
        %v1914 = vsub.f32 1.0, %v1850
        %v1915 = vsub.f32 1.0, %v1851
        %v1916 = vsub.f32 1.0, %v1852
        %v1917 = vsub.f32 1.0, %v1853
        %v1918 = vsub.f32 1.0, %v1854
        %v1919 = vsub.f32 1.0, %v1855
        %v1920 = vsub.f32 1.0, %v1856
        %v1921 = vsub.f32 1.0, %v1857
        %v1922 = vsub.f32 1.0, %v1858
        %v1923 = vsub.f32 1.0, %v1859
        %v1924 = vsub.f32 1.0, %v1860
        %v1925 = vsub.f32 1.0, %v1861
        %v1926 = vsub.f32 1.0, %v1862
        %v1927 = vsub.f32 1.0, %v1863
        %v1928 = vsub.f32 1.0, %v1864
        %v1929 = vsub.f32 1.0, %v1865
        %v1930 = vsub.f32 1.0, %v1866
        %v1931 = vsub.f32 1.0, %v1867
        %v1932 = vsub.f32 1.0, %v1868
        %v1933 = vsub.f32 1.0, %v1869
        %v1934 = vsub.f32 1.0, %v1870
        %v1935 = vsub.f32 1.0, %v1871
        %v1936 = vsub.f32 1.0, %v1872
        %v1937 = vsub.f32 1.0, %v1873
        %v1938 = vsub.f32 1.0, %v1874
        %v1939 = vsub.f32 1.0, %v1875
        %v1940 = vsub.f32 1.0, %v1876
        %v1941 = vsub.f32 1.0, %v1877
        %v1942 = vsub.f32 1.0, %v1878
        %v1943 = vsub.f32 1.0, %v1879
        %v1944 = vsub.f32 1.0, %v1880
        %v1945 = vsub.f32 1.0, %v1881
        %v1946 = vsub.f32 1.0, %v1882
        %v1947 = vsub.f32 1.0, %v1883
        %v1948 = vsub.f32 1.0, %v1884
        %v1949 = vsub.f32 1.0, %v1885
        %v1950 = vsub.f32 1.0, %v1886
        %v1951 = vsub.f32 1.0, %v1887
        %v1952 = vsub.f32 1.0, %v1888
        %v1953 = vsub.f32 1.0, %v1889
        %v1954 = vsub.f32 1.0, %v1890
        %v1955 = vsub.f32 1.0, %v1891
        %v1956 = vsub.f32 1.0, %v1892
        %v1957 = vsub.f32 1.0, %v1893
        %v1958 = vsub.f32 1.0, %v1894
        %v1959 = vsub.f32 1.0, %v1895
        %v1960 = vsub.f32 1.0, %v1896
        %v1961 = vsub.f32 1.0, %v1897
        %v1962 = vsub.f32 1.0, %v1898
        %v1963 = vsub.f32 1.0, %v1899
        %v1964 = vsub.f32 1.0, %v1900
        %v1965 = vsub.f32 1.0, %v1901
        %v1966 = vsub.f32 1.0, %v1902
        %v1967 = vsub.f32 1.0, %v1903
        %vm1968 = vcmp.lt.f32.partialorder %v688, 0.0
        %vm1969 = vcmp.lt.f32.partialorder %v689, 0.0
        %vm1970 = vcmp.lt.f32.partialorder %v690, 0.0
        %vm1971 = vcmp.lt.f32.partialorder %v691, 0.0
        %vm1972 = vcmp.lt.f32.partialorder %v692, 0.0
        %vm1973 = vcmp.lt.f32.partialorder %v693, 0.0
        %vm1974 = vcmp.lt.f32.partialorder %v694, 0.0
        %vm1975 = vcmp.lt.f32.partialorder %v695, 0.0
        %vm1976 = vcmp.lt.f32.partialorder %v696, 0.0
        %vm1977 = vcmp.lt.f32.partialorder %v697, 0.0
        %vm1978 = vcmp.lt.f32.partialorder %v698, 0.0
        %vm1979 = vcmp.lt.f32.partialorder %v699, 0.0
        %vm1980 = vcmp.lt.f32.partialorder %v700, 0.0
        %vm1981 = vcmp.lt.f32.partialorder %v701, 0.0
        %vm1982 = vcmp.lt.f32.partialorder %v702, 0.0
        %vm1983 = vcmp.lt.f32.partialorder %v703, 0.0
        %vm1984 = vcmp.lt.f32.partialorder %v704, 0.0
        %vm1985 = vcmp.lt.f32.partialorder %v705, 0.0
        %vm1986 = vcmp.lt.f32.partialorder %v706, 0.0
        %vm1987 = vcmp.lt.f32.partialorder %v707, 0.0
        %vm1988 = vcmp.lt.f32.partialorder %v708, 0.0
        %vm1989 = vcmp.lt.f32.partialorder %v709, 0.0
        %vm1990 = vcmp.lt.f32.partialorder %v710, 0.0
        %vm1991 = vcmp.lt.f32.partialorder %v711, 0.0
        %vm1992 = vcmp.lt.f32.partialorder %v712, 0.0
        %vm1993 = vcmp.lt.f32.partialorder %v713, 0.0
        %vm1994 = vcmp.lt.f32.partialorder %v714, 0.0
        %vm1995 = vcmp.lt.f32.partialorder %v715, 0.0
        %vm1996 = vcmp.lt.f32.partialorder %v716, 0.0
        %vm1997 = vcmp.lt.f32.partialorder %v717, 0.0
        %vm1998 = vcmp.lt.f32.partialorder %v718, 0.0
        %vm1999 = vcmp.lt.f32.partialorder %v719, 0.0
        %vm2000 = vcmp.lt.f32.partialorder %v720, 0.0
        %vm2001 = vcmp.lt.f32.partialorder %v721, 0.0
        %vm2002 = vcmp.lt.f32.partialorder %v722, 0.0
        %vm2003 = vcmp.lt.f32.partialorder %v723, 0.0
        %vm2004 = vcmp.lt.f32.partialorder %v724, 0.0
        %vm2005 = vcmp.lt.f32.partialorder %v725, 0.0
        %vm2006 = vcmp.lt.f32.partialorder %v726, 0.0
        %vm2007 = vcmp.lt.f32.partialorder %v727, 0.0
        %vm2008 = vcmp.lt.f32.partialorder %v728, 0.0
        %vm2009 = vcmp.lt.f32.partialorder %v729, 0.0
        %vm2010 = vcmp.lt.f32.partialorder %v730, 0.0
        %vm2011 = vcmp.lt.f32.partialorder %v731, 0.0
        %vm2012 = vcmp.lt.f32.partialorder %v732, 0.0
        %vm2013 = vcmp.lt.f32.partialorder %v733, 0.0
        %vm2014 = vcmp.lt.f32.partialorder %v734, 0.0
        %vm2015 = vcmp.lt.f32.partialorder %v735, 0.0
        %vm2016 = vcmp.lt.f32.partialorder %v736, 0.0
        %vm2017 = vcmp.lt.f32.partialorder %v737, 0.0
        %vm2018 = vcmp.lt.f32.partialorder %v738, 0.0
        %vm2019 = vcmp.lt.f32.partialorder %v739, 0.0
        %vm2020 = vcmp.lt.f32.partialorder %v740, 0.0
        %vm2021 = vcmp.lt.f32.partialorder %v741, 0.0
        %vm2022 = vcmp.lt.f32.partialorder %v742, 0.0
        %vm2023 = vcmp.lt.f32.partialorder %v743, 0.0
        %vm2024 = vcmp.lt.f32.partialorder %v744, 0.0
        %vm2025 = vcmp.lt.f32.partialorder %v745, 0.0
        %vm2026 = vcmp.lt.f32.partialorder %v746, 0.0
        %vm2027 = vcmp.lt.f32.partialorder %v747, 0.0
        %vm2028 = vcmp.lt.f32.partialorder %v748, 0.0
        %vm2029 = vcmp.lt.f32.partialorder %v749, 0.0
        %vm2030 = vcmp.lt.f32.partialorder %v750, 0.0
        %vm2031 = vcmp.lt.f32.partialorder %v751, 0.0
        %v2032 = vsub.f32 0.0, %v1904
        %v2033 = vsub.f32 0.0, %v1905
        %v2034 = vsub.f32 0.0, %v1906
        %v2035 = vsub.f32 0.0, %v1907
        %v2036 = vsub.f32 0.0, %v1908
        %v2037 = vsub.f32 0.0, %v1909
        %v2038 = vsub.f32 0.0, %v1910
        %v2039 = vsub.f32 0.0, %v1911
        %v2040 = vsub.f32 0.0, %v1912
        %v2041 = vsub.f32 0.0, %v1913
        %v2042 = vsub.f32 0.0, %v1914
        %v2043 = vsub.f32 0.0, %v1915
        %v2044 = vsub.f32 0.0, %v1916
        %v2045 = vsub.f32 0.0, %v1917
        %v2046 = vsub.f32 0.0, %v1918
        %v2047 = vsub.f32 0.0, %v1919
        %v2048 = vsub.f32 0.0, %v1920
        %v2049 = vsub.f32 0.0, %v1921
        %v2050 = vsub.f32 0.0, %v1922
        %v2051 = vsub.f32 0.0, %v1923
        %v2052 = vsub.f32 0.0, %v1924
        %v2053 = vsub.f32 0.0, %v1925
        %v2054 = vsub.f32 0.0, %v1926
        %v2055 = vsub.f32 0.0, %v1927
        %v2056 = vsub.f32 0.0, %v1928
        %v2057 = vsub.f32 0.0, %v1929
        %v2058 = vsub.f32 0.0, %v1930
        %v2059 = vsub.f32 0.0, %v1931
        %v2060 = vsub.f32 0.0, %v1932
        %v2061 = vsub.f32 0.0, %v1933
        %v2062 = vsub.f32 0.0, %v1934
        %v2063 = vsub.f32 0.0, %v1935
        %v2064 = vsub.f32 0.0, %v1936
        %v2065 = vsub.f32 0.0, %v1937
        %v2066 = vsub.f32 0.0, %v1938
        %v2067 = vsub.f32 0.0, %v1939
        %v2068 = vsub.f32 0.0, %v1940
        %v2069 = vsub.f32 0.0, %v1941
        %v2070 = vsub.f32 0.0, %v1942
        %v2071 = vsub.f32 0.0, %v1943
        %v2072 = vsub.f32 0.0, %v1944
        %v2073 = vsub.f32 0.0, %v1945
        %v2074 = vsub.f32 0.0, %v1946
        %v2075 = vsub.f32 0.0, %v1947
        %v2076 = vsub.f32 0.0, %v1948
        %v2077 = vsub.f32 0.0, %v1949
        %v2078 = vsub.f32 0.0, %v1950
        %v2079 = vsub.f32 0.0, %v1951
        %v2080 = vsub.f32 0.0, %v1952
        %v2081 = vsub.f32 0.0, %v1953
        %v2082 = vsub.f32 0.0, %v1954
        %v2083 = vsub.f32 0.0, %v1955
        %v2084 = vsub.f32 0.0, %v1956
        %v2085 = vsub.f32 0.0, %v1957
        %v2086 = vsub.f32 0.0, %v1958
        %v2087 = vsub.f32 0.0, %v1959
        %v2088 = vsub.f32 0.0, %v1960
        %v2089 = vsub.f32 0.0, %v1961
        %v2090 = vsub.f32 0.0, %v1962
        %v2091 = vsub.f32 0.0, %v1963
        %v2092 = vsub.f32 0.0, %v1964
        %v2093 = vsub.f32 0.0, %v1965
        %v2094 = vsub.f32 0.0, %v1966
        %v2095 = vsub.f32 0.0, %v1967
        %v2096 = vsel %vm1968, %v2032, %v1904
        %v2097 = vsel %vm1969, %v2033, %v1905
        %v2098 = vsel %vm1970, %v2034, %v1906
        %v2099 = vsel %vm1971, %v2035, %v1907
        %v2100 = vsel %vm1972, %v2036, %v1908
        %v2101 = vsel %vm1973, %v2037, %v1909
        %v2102 = vsel %vm1974, %v2038, %v1910
        %v2103 = vsel %vm1975, %v2039, %v1911
        %v2104 = vsel %vm1976, %v2040, %v1912
        %v2105 = vsel %vm1977, %v2041, %v1913
        %v2106 = vsel %vm1978, %v2042, %v1914
        %v2107 = vsel %vm1979, %v2043, %v1915
        %v2108 = vsel %vm1980, %v2044, %v1916
        %v2109 = vsel %vm1981, %v2045, %v1917
        %v2110 = vsel %vm1982, %v2046, %v1918
        %v2111 = vsel %vm1983, %v2047, %v1919
        %v2112 = vsel %vm1984, %v2048, %v1920
        %v2113 = vsel %vm1985, %v2049, %v1921
        %v2114 = vsel %vm1986, %v2050, %v1922
        %v2115 = vsel %vm1987, %v2051, %v1923
        %v2116 = vsel %vm1988, %v2052, %v1924
        %v2117 = vsel %vm1989, %v2053, %v1925
        %v2118 = vsel %vm1990, %v2054, %v1926
        %v2119 = vsel %vm1991, %v2055, %v1927
        %v2120 = vsel %vm1992, %v2056, %v1928
        %v2121 = vsel %vm1993, %v2057, %v1929
        %v2122 = vsel %vm1994, %v2058, %v1930
        %v2123 = vsel %vm1995, %v2059, %v1931
        %v2124 = vsel %vm1996, %v2060, %v1932
        %v2125 = vsel %vm1997, %v2061, %v1933
        %v2126 = vsel %vm1998, %v2062, %v1934
        %v2127 = vsel %vm1999, %v2063, %v1935
        %v2128 = vsel %vm2000, %v2064, %v1936
        %v2129 = vsel %vm2001, %v2065, %v1937
        %v2130 = vsel %vm2002, %v2066, %v1938
        %v2131 = vsel %vm2003, %v2067, %v1939
        %v2132 = vsel %vm2004, %v2068, %v1940
        %v2133 = vsel %vm2005, %v2069, %v1941
        %v2134 = vsel %vm2006, %v2070, %v1942
        %v2135 = vsel %vm2007, %v2071, %v1943
        %v2136 = vsel %vm2008, %v2072, %v1944
        %v2137 = vsel %vm2009, %v2073, %v1945
        %v2138 = vsel %vm2010, %v2074, %v1946
        %v2139 = vsel %vm2011, %v2075, %v1947
        %v2140 = vsel %vm2012, %v2076, %v1948
        %v2141 = vsel %vm2013, %v2077, %v1949
        %v2142 = vsel %vm2014, %v2078, %v1950
        %v2143 = vsel %vm2015, %v2079, %v1951
        %v2144 = vsel %vm2016, %v2080, %v1952
        %v2145 = vsel %vm2017, %v2081, %v1953
        %v2146 = vsel %vm2018, %v2082, %v1954
        %v2147 = vsel %vm2019, %v2083, %v1955
        %v2148 = vsel %vm2020, %v2084, %v1956
        %v2149 = vsel %vm2021, %v2085, %v1957
        %v2150 = vsel %vm2022, %v2086, %v1958
        %v2151 = vsel %vm2023, %v2087, %v1959
        %v2152 = vsel %vm2024, %v2088, %v1960
        %v2153 = vsel %vm2025, %v2089, %v1961
        %v2154 = vsel %vm2026, %v2090, %v1962
        %v2155 = vsel %vm2027, %v2091, %v1963
        %v2156 = vsel %vm2028, %v2092, %v1964
        %v2157 = vsel %vm2029, %v2093, %v1965
        %v2158 = vsel %vm2030, %v2094, %v1966
        %v2159 = vsel %vm2031, %v2095, %v1967
        %v2160 = vadd.f32 %v2096, 1.0
        %v2161 = vadd.f32 %v2097, 1.0
        %v2162 = vadd.f32 %v2098, 1.0
        %v2163 = vadd.f32 %v2099, 1.0
        %v2164 = vadd.f32 %v2100, 1.0
        %v2165 = vadd.f32 %v2101, 1.0
        %v2166 = vadd.f32 %v2102, 1.0
        %v2167 = vadd.f32 %v2103, 1.0
        %v2168 = vadd.f32 %v2104, 1.0
        %v2169 = vadd.f32 %v2105, 1.0
        %v2170 = vadd.f32 %v2106, 1.0
        %v2171 = vadd.f32 %v2107, 1.0
        %v2172 = vadd.f32 %v2108, 1.0
        %v2173 = vadd.f32 %v2109, 1.0
        %v2174 = vadd.f32 %v2110, 1.0
        %v2175 = vadd.f32 %v2111, 1.0
        %v2176 = vadd.f32 %v2112, 1.0
        %v2177 = vadd.f32 %v2113, 1.0
        %v2178 = vadd.f32 %v2114, 1.0
        %v2179 = vadd.f32 %v2115, 1.0
        %v2180 = vadd.f32 %v2116, 1.0
        %v2181 = vadd.f32 %v2117, 1.0
        %v2182 = vadd.f32 %v2118, 1.0
        %v2183 = vadd.f32 %v2119, 1.0
        %v2184 = vadd.f32 %v2120, 1.0
        %v2185 = vadd.f32 %v2121, 1.0
        %v2186 = vadd.f32 %v2122, 1.0
        %v2187 = vadd.f32 %v2123, 1.0
        %v2188 = vadd.f32 %v2124, 1.0
        %v2189 = vadd.f32 %v2125, 1.0
        %v2190 = vadd.f32 %v2126, 1.0
        %v2191 = vadd.f32 %v2127, 1.0
        %v2192 = vadd.f32 %v2128, 1.0
        %v2193 = vadd.f32 %v2129, 1.0
        %v2194 = vadd.f32 %v2130, 1.0
        %v2195 = vadd.f32 %v2131, 1.0
        %v2196 = vadd.f32 %v2132, 1.0
        %v2197 = vadd.f32 %v2133, 1.0
        %v2198 = vadd.f32 %v2134, 1.0
        %v2199 = vadd.f32 %v2135, 1.0
        %v2200 = vadd.f32 %v2136, 1.0
        %v2201 = vadd.f32 %v2137, 1.0
        %v2202 = vadd.f32 %v2138, 1.0
        %v2203 = vadd.f32 %v2139, 1.0
        %v2204 = vadd.f32 %v2140, 1.0
        %v2205 = vadd.f32 %v2141, 1.0
        %v2206 = vadd.f32 %v2142, 1.0
        %v2207 = vadd.f32 %v2143, 1.0
        %v2208 = vadd.f32 %v2144, 1.0
        %v2209 = vadd.f32 %v2145, 1.0
        %v2210 = vadd.f32 %v2146, 1.0
        %v2211 = vadd.f32 %v2147, 1.0
        %v2212 = vadd.f32 %v2148, 1.0
        %v2213 = vadd.f32 %v2149, 1.0
        %v2214 = vadd.f32 %v2150, 1.0
        %v2215 = vadd.f32 %v2151, 1.0
        %v2216 = vadd.f32 %v2152, 1.0
        %v2217 = vadd.f32 %v2153, 1.0
        %v2218 = vadd.f32 %v2154, 1.0
        %v2219 = vadd.f32 %v2155, 1.0
        %v2220 = vadd.f32 %v2156, 1.0
        %v2221 = vadd.f32 %v2157, 1.0
        %v2222 = vadd.f32 %v2158, 1.0
        %v2223 = vadd.f32 %v2159, 1.0
        %v2224 = vmul.f32 %v624, %v2160
        %v2225 = vmul.f32 %v625, %v2161
        %v2226 = vmul.f32 %v626, %v2162
        %v2227 = vmul.f32 %v627, %v2163
        %v2228 = vmul.f32 %v628, %v2164
        %v2229 = vmul.f32 %v629, %v2165
        %v2230 = vmul.f32 %v630, %v2166
        %v2231 = vmul.f32 %v631, %v2167
        %v2232 = vmul.f32 %v632, %v2168
        %v2233 = vmul.f32 %v633, %v2169
        %v2234 = vmul.f32 %v634, %v2170
        %v2235 = vmul.f32 %v635, %v2171
        %v2236 = vmul.f32 %v636, %v2172
        %v2237 = vmul.f32 %v637, %v2173
        %v2238 = vmul.f32 %v638, %v2174
        %v2239 = vmul.f32 %v639, %v2175
        %v2240 = vmul.f32 %v640, %v2176
        %v2241 = vmul.f32 %v641, %v2177
        %v2242 = vmul.f32 %v642, %v2178
        %v2243 = vmul.f32 %v643, %v2179
        %v2244 = vmul.f32 %v644, %v2180
        %v2245 = vmul.f32 %v645, %v2181
        %v2246 = vmul.f32 %v646, %v2182
        %v2247 = vmul.f32 %v647, %v2183
        %v2248 = vmul.f32 %v648, %v2184
        %v2249 = vmul.f32 %v649, %v2185
        %v2250 = vmul.f32 %v650, %v2186
        %v2251 = vmul.f32 %v651, %v2187
        %v2252 = vmul.f32 %v652, %v2188
        %v2253 = vmul.f32 %v653, %v2189
        %v2254 = vmul.f32 %v654, %v2190
        %v2255 = vmul.f32 %v655, %v2191
        %v2256 = vmul.f32 %v656, %v2192
        %v2257 = vmul.f32 %v657, %v2193
        %v2258 = vmul.f32 %v658, %v2194
        %v2259 = vmul.f32 %v659, %v2195
        %v2260 = vmul.f32 %v660, %v2196
        %v2261 = vmul.f32 %v661, %v2197
        %v2262 = vmul.f32 %v662, %v2198
        %v2263 = vmul.f32 %v663, %v2199
        %v2264 = vmul.f32 %v664, %v2200
        %v2265 = vmul.f32 %v665, %v2201
        %v2266 = vmul.f32 %v666, %v2202
        %v2267 = vmul.f32 %v667, %v2203
        %v2268 = vmul.f32 %v668, %v2204
        %v2269 = vmul.f32 %v669, %v2205
        %v2270 = vmul.f32 %v670, %v2206
        %v2271 = vmul.f32 %v671, %v2207
        %v2272 = vmul.f32 %v672, %v2208
        %v2273 = vmul.f32 %v673, %v2209
        %v2274 = vmul.f32 %v674, %v2210
        %v2275 = vmul.f32 %v675, %v2211
        %v2276 = vmul.f32 %v676, %v2212
        %v2277 = vmul.f32 %v677, %v2213
        %v2278 = vmul.f32 %v678, %v2214
        %v2279 = vmul.f32 %v679, %v2215
        %v2280 = vmul.f32 %v680, %v2216
        %v2281 = vmul.f32 %v681, %v2217
        %v2282 = vmul.f32 %v682, %v2218
        %v2283 = vmul.f32 %v683, %v2219
        %v2284 = vmul.f32 %v684, %v2220
        %v2285 = vmul.f32 %v685, %v2221
        %v2286 = vmul.f32 %v686, %v2222
        %v2287 = vmul.f32 %v687, %v2223
        %v2288 = vpack.c.bf16 %v2226, %v2224
        %v2289 = vpack.c.bf16 %v2227, %v2225
        %v2290 = vpack.c.bf16 %v2230, %v2228
        %v2291 = vpack.c.bf16 %v2231, %v2229
        %v2292 = vpack.c.bf16 %v2234, %v2232
        %v2293 = vpack.c.bf16 %v2235, %v2233
        %v2294 = vpack.c.bf16 %v2238, %v2236
        %v2295 = vpack.c.bf16 %v2239, %v2237
        %v2296 = vpack.c.bf16 %v2242, %v2240
        %v2297 = vpack.c.bf16 %v2243, %v2241
        %v2298 = vpack.c.bf16 %v2246, %v2244
        %v2299 = vpack.c.bf16 %v2247, %v2245
        %v2300 = vpack.c.bf16 %v2250, %v2248
        %v2301 = vpack.c.bf16 %v2251, %v2249
        %v2302 = vpack.c.bf16 %v2254, %v2252
        %v2303 = vpack.c.bf16 %v2255, %v2253
        %v2304 = vpack.c.bf16 %v2258, %v2256
        %v2305 = vpack.c.bf16 %v2259, %v2257
        %v2306 = vpack.c.bf16 %v2262, %v2260
        %v2307 = vpack.c.bf16 %v2263, %v2261
        %v2308 = vpack.c.bf16 %v2266, %v2264
        %v2309 = vpack.c.bf16 %v2267, %v2265
        %v2310 = vpack.c.bf16 %v2270, %v2268
        %v2311 = vpack.c.bf16 %v2271, %v2269
        %v2312 = vpack.c.bf16 %v2274, %v2272
        %v2313 = vpack.c.bf16 %v2275, %v2273
        %v2314 = vpack.c.bf16 %v2278, %v2276
        %v2315 = vpack.c.bf16 %v2279, %v2277
        %v2316 = vpack.c.bf16 %v2282, %v2280
        %v2317 = vpack.c.bf16 %v2283, %v2281
        %v2318 = vpack.c.bf16 %v2286, %v2284
        %v2319 = vpack.c.bf16 %v2287, %v2285
        %v2320 = vld [vmem:[#allocation7] sm:$0xf]
        %v2321 = vld [vmem:[#allocation7 + $0x4] sm:$0xf]
        %v2322 = vld [vmem:[#allocation7 + $0x8] sm:$0xf]
        %v2323 = vld [vmem:[#allocation7 + $0xc] sm:$0xf]
        %v2324 = vld [vmem:[#allocation7 + $0x10] sm:$0xf]
        %v2325 = vld [vmem:[#allocation7 + $0x14] sm:$0xf]
        %v2326 = vld [vmem:[#allocation7 + $0x18] sm:$0xf]
        %v2327 = vld [vmem:[#allocation7 + $0x1c] sm:$0xf]
        %v2328 = vld [vmem:[#allocation7 + $0x20] sm:$0xf]
        %v2329 = vld [vmem:[#allocation7 + $0x24] sm:$0xf]
        %v2330 = vld [vmem:[#allocation7 + $0x28] sm:$0xf]
        %v2331 = vld [vmem:[#allocation7 + $0x2c] sm:$0xf]
        %v2332 = vld [vmem:[#allocation7 + $0x30] sm:$0xf]
        %v2333 = vld [vmem:[#allocation7 + $0x34] sm:$0xf]
        %v2334 = vld [vmem:[#allocation7 + $0x38] sm:$0xf]
        %v2335 = vld [vmem:[#allocation7 + $0x3c] sm:$0xf]
        %v2336 = vld [vmem:[#allocation7 + $0x40] sm:$0xf]
        %v2337 = vld [vmem:[#allocation7 + $0x44] sm:$0xf]
        %v2338 = vld [vmem:[#allocation7 + $0x48] sm:$0xf]
        %v2339 = vld [vmem:[#allocation7 + $0x4c] sm:$0xf]
        %v2340 = vld [vmem:[#allocation7 + $0x50] sm:$0xf]
        %v2341 = vld [vmem:[#allocation7 + $0x54] sm:$0xf]
        %v2342 = vld [vmem:[#allocation7 + $0x58] sm:$0xf]
        %v2343 = vld [vmem:[#allocation7 + $0x5c] sm:$0xf]
        %v2344 = vld [vmem:[#allocation7 + $0x60] sm:$0xf]
        %v2345 = vld [vmem:[#allocation7 + $0x64] sm:$0xf]
        %v2346 = vld [vmem:[#allocation7 + $0x68] sm:$0xf]
        %v2347 = vld [vmem:[#allocation7 + $0x6c] sm:$0xf]
        %v2348 = vld [vmem:[#allocation7 + $0x70] sm:$0xf]
        %v2349 = vld [vmem:[#allocation7 + $0x74] sm:$0xf]
        %v2350 = vld [vmem:[#allocation7 + $0x78] sm:$0xf]
        %v2351 = vld [vmem:[#allocation7 + $0x7c] sm:$0xf]
        %v2352 = vld [vmem:[%s4] sm:$0x1]
        %v2354 = vlaneseq
        %v2355 = vshrl.u32 %v2354, 7
        %v2356 = vsub.s32 0, %v2355
        %v2357 = vrot.slane %v2352, %v2356
        %v2391 = vunpack.c.l.b16 %v2320
        %v2392 = vunpack.c.l.b16 %v2321
        %v2393 = vunpack.c.l.b16 %v2322
        %v2394 = vunpack.c.l.b16 %v2323
        %v2395 = vunpack.c.l.b16 %v2324
        %v2396 = vunpack.c.l.b16 %v2325
        %v2397 = vunpack.c.l.b16 %v2326
        %v2398 = vunpack.c.l.b16 %v2327
        %v2399 = vunpack.c.l.b16 %v2328
        %v2400 = vunpack.c.l.b16 %v2329
        %v2401 = vunpack.c.l.b16 %v2330
        %v2402 = vunpack.c.l.b16 %v2331
        %v2403 = vunpack.c.l.b16 %v2332
        %v2404 = vunpack.c.l.b16 %v2333
        %v2405 = vunpack.c.l.b16 %v2334
        %v2406 = vunpack.c.l.b16 %v2335
        %v2407 = vunpack.c.l.b16 %v2336
        %v2408 = vunpack.c.l.b16 %v2337
        %v2409 = vunpack.c.l.b16 %v2338
        %v2410 = vunpack.c.l.b16 %v2339
        %v2411 = vunpack.c.l.b16 %v2340
        %v2412 = vunpack.c.l.b16 %v2341
        %v2413 = vunpack.c.l.b16 %v2342
        %v2414 = vunpack.c.l.b16 %v2343
        %v2415 = vunpack.c.l.b16 %v2344
        %v2416 = vunpack.c.l.b16 %v2345
        %v2417 = vunpack.c.l.b16 %v2346
        %v2418 = vunpack.c.l.b16 %v2347
        %v2419 = vunpack.c.l.b16 %v2348
        %v2420 = vunpack.c.l.b16 %v2349
        %v2421 = vunpack.c.l.b16 %v2350
        %v2422 = vunpack.c.l.b16 %v2351
        %v2423 = vpack.c.b16 %v2392, %v2391
        %v2424 = vpack.c.b16 %v2394, %v2393
        %v2425 = vpack.c.b16 %v2396, %v2395
        %v2426 = vpack.c.b16 %v2398, %v2397
        %v2427 = vpack.c.b16 %v2400, %v2399
        %v2428 = vpack.c.b16 %v2402, %v2401
        %v2429 = vpack.c.b16 %v2404, %v2403
        %v2430 = vpack.c.b16 %v2406, %v2405
        %v2431 = vpack.c.b16 %v2408, %v2407
        %v2432 = vpack.c.b16 %v2410, %v2409
        %v2433 = vpack.c.b16 %v2412, %v2411
        %v2434 = vpack.c.b16 %v2414, %v2413
        %v2435 = vpack.c.b16 %v2416, %v2415
        %v2436 = vpack.c.b16 %v2418, %v2417
        %v2437 = vpack.c.b16 %v2420, %v2419
        %v2438 = vpack.c.b16 %v2422, %v2421
        %2455 = vmatprep.subr.bf16.mxu0 0
        %2456 = vmatpush1.bf16.msra.mxu0 %v2423
        %2457 = vmatprep.subr.bf16.mxu0 0
        %2458 = vmatpush1.bf16.msra.mxu0 %v2424
        %2459 = vmatprep.subr.bf16.mxu0 0
        %2460 = vmatpush1.bf16.msra.mxu0 %v2425
        %2461 = vmatprep.subr.bf16.mxu0 0
        %2462 = vmatpush1.bf16.msra.mxu0 %v2426
        %2463 = vmatprep.subr.bf16.mxu0 0
        %2464 = vmatpush1.bf16.msra.mxu0 %v2427
        %2465 = vmatprep.subr.bf16.mxu0 0
        %2466 = vmatpush1.bf16.msra.mxu0 %v2428
        %2467 = vmatprep.subr.bf16.mxu0 0
        %2468 = vmatpush1.bf16.msra.mxu0 %v2429
        %2469 = vmatprep.subr.bf16.mxu0 0
        %2470 = vmatpush1.bf16.msra.mxu0 %v2430
        %2471 = vmatprep.subr.bf16.mxu0 0
        %2472 = vmatpush1.bf16.msra.mxu0 %v2431
        %2473 = vmatprep.subr.bf16.mxu0 0
        %2474 = vmatpush1.bf16.msra.mxu0 %v2432
        %2475 = vmatprep.subr.bf16.mxu0 0
        %2476 = vmatpush1.bf16.msra.mxu0 %v2433
        %2477 = vmatprep.subr.bf16.mxu0 0
        %2478 = vmatpush1.bf16.msra.mxu0 %v2434
        %2479 = vmatprep.subr.bf16.mxu0 0
        %2480 = vmatpush1.bf16.msra.mxu0 %v2435
        %2481 = vmatprep.subr.bf16.mxu0 0
        %2482 = vmatpush1.bf16.msra.mxu0 %v2436
        %2483 = vmatprep.subr.bf16.mxu0 0
        %2484 = vmatpush1.bf16.msra.mxu0 %v2437
        %2485 = vmatprep.subr.bf16.mxu0 0
        %2486 = vmatpush1.bf16.msra.mxu0 %v2438
        %2487 = vmatprep.mubr.bf16.mxu0 %v2289
        %2488 = vmatmul.mubr.bf16.gmra.mrb[0].mxu0 %v2288
        %v2489 = vpop.f32.mrb[0].mxu0
        %v2490 = vadd.f32 %v2357, %v2489
        %v2491 = vpop.f32.mrb[0].mxu0
        %v2492 = vpop.f32.mrb[0].mxu0
        %v2493 = vadd.f32 %v2357, %v2492
        %v2494 = vpop.f32.mrb[0].mxu0
        %2495 = vmatprep.mubr.bf16.mxu0 %v2291
        %2496 = vmatmul.mubr.bf16.gmra.mrb[0].mxu0 %v2290
        %v2497 = vpop.f32.mrb[0].mxu0
        %v2498 = vadd.f32 %v2357, %v2497
        %v2499 = vpop.f32.mrb[0].mxu0
        %v2500 = vpop.f32.mrb[0].mxu0
        %v2501 = vadd.f32 %v2357, %v2500
        %v2502 = vpop.f32.mrb[0].mxu0
        %2503 = vmatprep.mubr.bf16.mxu0 %v2293
        %2504 = vmatmul.mubr.bf16.gmra.mrb[0].mxu0 %v2292
        %v2505 = vpop.f32.mrb[0].mxu0
        %v2506 = vadd.f32 %v2357, %v2505
        %v2507 = vpop.f32.mrb[0].mxu0
        %v2508 = vpop.f32.mrb[0].mxu0
        %v2509 = vadd.f32 %v2357, %v2508
        %v2510 = vpop.f32.mrb[0].mxu0
        %2511 = vmatprep.mubr.bf16.mxu0 %v2295
        %2512 = vmatmul.mubr.bf16.gmra.mrb[0].mxu0 %v2294
        %v2513 = vpop.f32.mrb[0].mxu0
        %v2514 = vadd.f32 %v2357, %v2513
        %v2515 = vpop.f32.mrb[0].mxu0
        %v2516 = vpop.f32.mrb[0].mxu0
        %v2517 = vadd.f32 %v2357, %v2516
        %v2518 = vpop.f32.mrb[0].mxu0
        %2519 = vmatprep.mubr.bf16.mxu0 %v2297
        %2520 = vmatmul.mubr.bf16.gmra.mrb[0].mxu0 %v2296
        %v2521 = vpop.f32.mrb[0].mxu0
        %v2522 = vadd.f32 %v2357, %v2521
        %v2523 = vpop.f32.mrb[0].mxu0
        %v2524 = vpop.f32.mrb[0].mxu0
        %v2525 = vadd.f32 %v2357, %v2524
        %v2526 = vpop.f32.mrb[0].mxu0
        %2527 = vmatprep.mubr.bf16.mxu0 %v2299
        %2528 = vmatmul.mubr.bf16.gmra.mrb[0].mxu0 %v2298
        %v2529 = vpop.f32.mrb[0].mxu0
        %v2530 = vadd.f32 %v2357, %v2529
        %v2531 = vpop.f32.mrb[0].mxu0
        %v2532 = vpop.f32.mrb[0].mxu0
        %v2533 = vadd.f32 %v2357, %v2532
        %v2534 = vpop.f32.mrb[0].mxu0
        %2535 = vmatprep.mubr.bf16.mxu0 %v2301
        %2536 = vmatmul.mubr.bf16.gmra.mrb[0].mxu0 %v2300
        %v2537 = vpop.f32.mrb[0].mxu0
        %v2538 = vadd.f32 %v2357, %v2537
        %v2539 = vpop.f32.mrb[0].mxu0
        %v2540 = vpop.f32.mrb[0].mxu0
        %v2541 = vadd.f32 %v2357, %v2540
        %v2542 = vpop.f32.mrb[0].mxu0
        %2543 = vmatprep.mubr.bf16.mxu0 %v2303
        %2544 = vmatmul.mubr.bf16.gmra.mrb[0].mxu0 %v2302
        %v2545 = vpop.f32.mrb[0].mxu0
        %v2546 = vadd.f32 %v2357, %v2545
        %v2547 = vpop.f32.mrb[0].mxu0
        %v2548 = vpop.f32.mrb[0].mxu0
        %v2549 = vadd.f32 %v2357, %v2548
        %v2550 = vpop.f32.mrb[0].mxu0
        %2551 = vmatprep.mubr.bf16.mxu0 %v2305
        %2552 = vmatmul.mubr.bf16.gmra.mrb[0].mxu0 %v2304
        %v2553 = vpop.f32.mrb[0].mxu0
        %v2554 = vadd.f32 %v2357, %v2553
        %v2555 = vpop.f32.mrb[0].mxu0
        %v2556 = vpop.f32.mrb[0].mxu0
        %v2557 = vadd.f32 %v2357, %v2556
        %v2558 = vpop.f32.mrb[0].mxu0
        %2559 = vmatprep.mubr.bf16.mxu0 %v2307
        %2560 = vmatmul.mubr.bf16.gmra.mrb[0].mxu0 %v2306
        %v2561 = vpop.f32.mrb[0].mxu0
        %v2562 = vadd.f32 %v2357, %v2561
        %v2563 = vpop.f32.mrb[0].mxu0
        %v2564 = vpop.f32.mrb[0].mxu0
        %v2565 = vadd.f32 %v2357, %v2564
        %v2566 = vpop.f32.mrb[0].mxu0
        %2567 = vmatprep.mubr.bf16.mxu0 %v2309
        %2568 = vmatmul.mubr.bf16.gmra.mrb[0].mxu0 %v2308
        %v2569 = vpop.f32.mrb[0].mxu0
        %v2570 = vadd.f32 %v2357, %v2569
        %v2571 = vpop.f32.mrb[0].mxu0
        %v2572 = vpop.f32.mrb[0].mxu0
        %v2573 = vadd.f32 %v2357, %v2572
        %v2574 = vpop.f32.mrb[0].mxu0
        %2575 = vmatprep.mubr.bf16.mxu0 %v2311
        %2576 = vmatmul.mubr.bf16.gmra.mrb[0].mxu0 %v2310
        %v2577 = vpop.f32.mrb[0].mxu0
        %v2578 = vadd.f32 %v2357, %v2577
        %v2579 = vpop.f32.mrb[0].mxu0
        %v2580 = vpop.f32.mrb[0].mxu0
        %v2581 = vadd.f32 %v2357, %v2580
        %v2582 = vpop.f32.mrb[0].mxu0
        %2583 = vmatprep.mubr.bf16.mxu0 %v2313
        %2584 = vmatmul.mubr.bf16.gmra.mrb[0].mxu0 %v2312
        %v2585 = vpop.f32.mrb[0].mxu0
        %v2586 = vadd.f32 %v2357, %v2585
        %v2587 = vpop.f32.mrb[0].mxu0
        %v2588 = vpop.f32.mrb[0].mxu0
        %v2589 = vadd.f32 %v2357, %v2588
        %v2590 = vpop.f32.mrb[0].mxu0
        %2591 = vmatprep.mubr.bf16.mxu0 %v2315
        %2592 = vmatmul.mubr.bf16.gmra.mrb[0].mxu0 %v2314
        %v2593 = vpop.f32.mrb[0].mxu0
        %v2594 = vadd.f32 %v2357, %v2593
        %v2595 = vpop.f32.mrb[0].mxu0
        %v2596 = vpop.f32.mrb[0].mxu0
        %v2597 = vadd.f32 %v2357, %v2596
        %v2598 = vpop.f32.mrb[0].mxu0
        %2599 = vmatprep.mubr.bf16.mxu0 %v2317
        %2600 = vmatmul.mubr.bf16.gmra.mrb[0].mxu0 %v2316
        %v2601 = vpop.f32.mrb[0].mxu0
        %v2602 = vadd.f32 %v2357, %v2601
        %v2603 = vpop.f32.mrb[0].mxu0
        %v2604 = vpop.f32.mrb[0].mxu0
        %v2605 = vadd.f32 %v2357, %v2604
        %v2606 = vpop.f32.mrb[0].mxu0
        %2607 = vmatprep.mubr.bf16.mxu0 %v2319
        %2608 = vmatmul.mubr.bf16.gmra.mrb[0].mxu0 %v2318
        %v2609 = vpop.f32.mrb[0].mxu0
        %v2610 = vadd.f32 %v2357, %v2609
        %v2611 = vpop.f32.mrb[0].mxu0
        %v2612 = vpop.f32.mrb[0].mxu0
        %v2613 = vadd.f32 %v2357, %v2612
        %v2614 = vpop.f32.mrb[0].mxu0
        %2615 = vdwg.mxu0
        %2616 = vst [vmem:[%s271] sm:$0xff] %v2490
        %2617 = vst [vmem:[%s271 + $0x8] sm:$0xff] %v2493
        %2618 = vst [vmem:[%s271 + $0x10] sm:$0xff] %v2498
        %2619 = vst [vmem:[%s271 + $0x18] sm:$0xff] %v2501
        %2620 = vst [vmem:[%s271 + $0x20] sm:$0xff] %v2506
        %2621 = vst [vmem:[%s271 + $0x28] sm:$0xff] %v2509
        %2622 = vst [vmem:[%s271 + $0x30] sm:$0xff] %v2514
        %2623 = vst [vmem:[%s271 + $0x38] sm:$0xff] %v2517
        %2624 = vst [vmem:[%s271 + $0x40] sm:$0xff] %v2522
        %2625 = vst [vmem:[%s271 + $0x48] sm:$0xff] %v2525
        %2626 = vst [vmem:[%s271 + $0x50] sm:$0xff] %v2530
        %2627 = vst [vmem:[%s271 + $0x58] sm:$0xff] %v2533
        %2628 = vst [vmem:[%s271 + $0x60] sm:$0xff] %v2538
        %2629 = vst [vmem:[%s271 + $0x68] sm:$0xff] %v2541
        %2630 = vst [vmem:[%s271 + $0x70] sm:$0xff] %v2546
        %2631 = vst [vmem:[%s271 + $0x78] sm:$0xff] %v2549
        %2632 = vst [vmem:[%s271 + $0x80] sm:$0xff] %v2554
        %2633 = vst [vmem:[%s271 + $0x88] sm:$0xff] %v2557
        %2634 = vst [vmem:[%s271 + $0x90] sm:$0xff] %v2562
        %2635 = vst [vmem:[%s271 + $0x98] sm:$0xff] %v2565
        %2636 = vst [vmem:[%s271 + $0xa0] sm:$0xff] %v2570
        %2637 = vst [vmem:[%s271 + $0xa8] sm:$0xff] %v2573
        %2638 = vst [vmem:[%s271 + $0xb0] sm:$0xff] %v2578
        %2639 = vst [vmem:[%s271 + $0xb8] sm:$0xff] %v2581
        %2640 = vst [vmem:[%s271 + $0xc0] sm:$0xff] %v2586
        %2641 = vst [vmem:[%s271 + $0xc8] sm:$0xff] %v2589
        %2642 = vst [vmem:[%s271 + $0xd0] sm:$0xff] %v2594
        %2643 = vst [vmem:[%s271 + $0xd8] sm:$0xff] %v2597
        %2644 = vst [vmem:[%s271 + $0xe0] sm:$0xff] %v2602
        %2645 = vst [vmem:[%s271 + $0xe8] sm:$0xff] %v2605
        %2646 = vst [vmem:[%s271 + $0xf0] sm:$0xff] %v2610
        %2647 = vst [vmem:[%s271 + $0xf8] sm:$0xff] %v2613
        %s2648 = sand.u32 %s141, 1
        %s2649 = scalar_lea.sflag [#allocation4], %s2648
        %s2650 = sand.u32 %s141, 1
        %s2651 = smul.addr %s2650, 256
        %s2652 = scalar_lea.vmem [#allocation8], %s2651
        // Predicated region
        $region53: #{mlp_forward.1} parent=39 // pred_check
          %p2653 = pneg %p151
        $region54: #{mlp_forward.1} parent=39 // pred_check_branch
          %2655 = sbr.rel (%p2653) target = $region56
        $region55: #{mlp_forward.1} parent=39 // pred_region
          %s2656 = smul.u32 32, %s23
          %s2658 = ssub.s32 4096, 4096
          %2659 = vsyncadd %s2649, %s2658
          %s2660 = smul.addr %s2656, 128
          %s2661 = scalar_lea.hbm %s5, %s2660
          %s2662 = sshll.u32 %s2652, 4
          %s2663 = int_to_ptr.vmem [resolvable:$true] %s2662
          %2668 = dma.vmem_to_hbm [thread:$0]  %s2663, 4096, %s2661, %s2649, 128, 128, 8
        $region56: #{mlp_forward.1} parent=39 // pred_fallthru
          _
      $region40: #{mlp_forward.1} parent=5 // pred_fallthru
        _
      %p2669 = scmp.le.s32.totalorder 2, %s18
      // Predicated region
      $region57: #{mlp_forward.1} parent=5 // pred_check
        %p2670 = pneg %p2669
      $region58: #{mlp_forward.1} parent=5 // pred_check_branch
        %2672 = sbr.rel (%p2670) target = $region60
      $region59: #{mlp_forward.1} parent=5 // pred_region
        %s2673 = ssub.s32 %s18, 2
        // Predicated region
        $region61: #{mlp_forward.1} parent=59 // pred_check
          %p2674 = pneg %p157
        $region62: #{mlp_forward.1} parent=59 // pred_check_branch
          %2676 = sbr.rel (%p2674) target = $region64
        $region63: #{mlp_forward.1} parent=59 // pred_region
          %s2677 = sand.u32 %s142, 1
          %s2678 = scalar_lea.sflag [#allocation4], %s2677
          %s2679 = sand.u32 %s142, 1
          %s2680 = smul.addr %s2679, 256
          %s2681 = scalar_lea.vmem [#allocation8], %s2680
          %2682 = dma.done %s2678, 4096
        $region64: #{mlp_forward.1} parent=59 // pred_fallthru
          _
      $region60: #{mlp_forward.1} parent=5 // pred_fallthru
        _
    $region6: #{mlp_forward.1} parent=1 // loop_footer
      %s22 = sadd.s32 1, %s18
    $region7: #{mlp_forward.1} parent=1 // loop_footer_branch
      %17 = sbr.rel target = $region3
    $region8: #{mlp_forward.1} parent=1 // loop_exit
      _
    %2683 = vsyncpa [#allocation3], 1
    %s2684 = scalar_lea.sflag [#allocation3], 1
    %2685 = vsyncpa %s2684, 1
    %2686 = vsyncpa [#allocation6], 1
    %2687 = vsyncpa [#allocation4], 1
    %s2688 = scalar_lea.sflag [#allocation4], 1
    %2689 = vsyncpa %s2688, 1

</llo_original>
